<compile_context>
chip_gen: v6e
topology: v6e:2x2x1
jax: 0.10.0
libtpu: 0.0.40
codegen_flags: <defaults>
</compile_context>

<pallas_src>
import functools

import jax
import jax.numpy as jnp
from jax import lax
from jax.experimental import pallas as pl
from jax.experimental.pallas import tpu as pltpu


def _resblock_kernel(x_ref, w1_ref, w2_ref, s1_ref, sh1_ref, s2_ref, sh2_ref,
                     out_ref, *, L, K, fused_slab):
    """One grid step == one (rows, C) row block (TB whole batch elements).

    x_ref   : (rows, C)   channels-last activations, rows = TB*L
    w*_ref  : (K, C, C)   conv weights, (tap, in_ch, out_ch), bf16, resident
    s*_ref  : (1, C)      folded BN scale  (gamma / sqrt(var + eps)), f32
    sh*_ref : (1, C)      folded BN shift  (includes conv bias), f32
    out_ref : (rows, C)
    """
    rows, C = x_ref.shape
    pad = (K - 1) // 2

    x_raw = x_ref[...]
    x_f32 = x_raw.astype(jnp.float32)

    # Hoisted, data-independent tap-validity masks (shared by both convs).
    # Each row's position inside its own sequence; rows never mix positions
    # across batch elements because rows = TB * L with whole sequences.
    l_idx = lax.broadcasted_iota(jnp.int32, (rows, C), 0) % L
    masks = {d: (l_idx >= -d) & (l_idx < L - d)
             for d in range(-pad, pad + 1) if d != 0}

    def taps_of(t_f32):
        """K shifted copies of t (zero outside the sequence), bf16."""
        taps = []
        for k in range(K):
            d = k - pad                                  # tap k reads t[l + d]
            if d == 0:
                taps.append(t_f32.astype(jnp.bfloat16))
            else:
                rolled = pltpu.roll(t_f32, (-d) % rows, axis=0)   # rolled[r]=t[r+d]
                taps.append(jnp.where(masks[d], rolled.astype(jnp.bfloat16),
                                      jnp.bfloat16(0)))
        return taps

    def conv(t_f32, w_ref):
        taps = taps_of(t_f32)
        if fused_slab:
            # Lane-dense C: one deep contraction fills the 256-deep MXU.
            slab = jnp.concatenate(taps, axis=-1)                 # (rows, K*C)
            w = w_ref[...].reshape(K * C, C)
            return jnp.dot(slab, w, preferred_element_type=jnp.float32)
        # Per-tap accumulating dots: no im2col slab, ideal for v5e / large C.
        acc = jnp.dot(taps[0], w_ref[0], preferred_element_type=jnp.float32)
        for k in range(1, K):
            acc = acc + jnp.dot(taps[k], w_ref[k],
                                preferred_element_type=jnp.float32)
        return acc

    # ---- conv1 + folded BN1 + ReLU (Dropout is identity in eval mode) ----
    y = jnp.maximum(conv(x_f32, w1_ref) * s1_ref[...] + sh1_ref[...], 0.0)
    # TODO(synk): training-mode Dropout / batch-statistics BatchNorm not
    # implemented (eval semantics: dropout = identity, BN = running stats).

    # ---- conv2 + folded BN2 ----
    y2 = conv(y, w2_ref) * s2_ref[...] + sh2_ref[...]

    # ---- residual add + ReLU (f32 epilogue) ----
    out_ref[...] = jnp.maximum(x_f32 + y2, 0.0).astype(out_ref.dtype)


def _round_up(x, m):
    return ((x + m - 1) // m) * m


def _pick_batch_tile(B, L, itemsize, target_rows=512):
    """Pick TB so rows=TB*L is sublane-aligned, ~target_rows, and the grid has
    >= 2 steps whenever B >= 2 (keeps both v7x TensorCores busy)."""
    sub = 8 * 4 // max(itemsize, 1)                      # 8 f32 / 16 bf16 / 32 i8
    cands = [tb for tb in range(1, B + 1)
             if B % tb == 0 and ((tb * L) % sub == 0 or tb == B)]
    multi = [tb for tb in cands if B // tb >= 2]
    pool = multi if multi else cands
    fit = [tb for tb in pool if tb * L <= target_rows]
    return max(fit) if fit else min(pool)


def _vmem_limit_bytes(rows, C, K, act_itemsize, out_itemsize, fused_slab):
    """Explicit VMEM estimate, capped below the chip's physical VMEM."""
    lanes = _round_up(C, 128)                            # in-VMEM lane padding
    srows = _round_up(rows, 8)
    blk = srows * lanes
    est = (2 * blk * act_itemsize                        # double-buffered x block
           + 2 * blk * out_itemsize                      # double-buffered out block
           + 2 * 2 * K * _round_up(C, 16) * lanes * 2    # two bf16 weight stacks
           + 2 * 4 * lanes * 4                           # scales / shifts
           + blk * 2 * (2 * K if fused_slab else K)      # bf16 taps (+ slab)
           + blk * 4 * 3                                 # f32 x, y, y2
           + blk * 4 * (K - 1))                          # masks / rolled temporaries
    est = int(est * 1.5) + (8 << 20)                     # Mosaic scratch headroom
    try:
        cap = pltpu.get_tpu_info().vmem_capacity_bytes - (16 << 20)
    except Exception:
        cap = 48 << 20                                   # safe on v5e/v6e/v7x
    return int(min(cap, max(est, 32 << 20)))


def resnet_block_pallas(x_blc, params, *, kernel_size=3, eps=1e-5,
                        batch_tile=None):
    """x_blc: (B, L, C) channels-last activations. Returns (B, L, C)."""
    B, L, C = x_blc.shape
    K = kernel_size
    assert K % 2 == 1, "only odd kernel_size supported (PyTorch 'same' padding)"

    # ---- fold BN (running stats) + conv bias into per-channel scale/shift ----
    def fold(gamma, beta, mean, var, conv_bias):
        gamma, beta, mean, var, conv_bias = (
            a.astype(jnp.float32) for a in (gamma, beta, mean, var, conv_bias))
        scale = gamma / jnp.sqrt(var + eps)
        shift = beta + (conv_bias - mean) * scale
        return scale.reshape(1, C), shift.reshape(1, C)

    s1, sh1 = fold(params["bn1_gamma"], params["bn1_beta"],
                   params["bn1_mean"], params["bn1_var"], params["conv1_b"])
    s2, sh2 = fold(params["bn2_gamma"], params["bn2_beta"],
                   params["bn2_mean"], params["bn2_var"], params["conv2_b"])

    # ---- conv weights (C_out, C_in, K) -> (K, C_in, C_out), bf16, resident ----
    def prep_w(w):
        return jnp.transpose(w, (2, 1, 0)).astype(jnp.bfloat16)

    w1 = prep_w(params["conv1_w"])
    w2 = prep_w(params["conv2_w"])

    # ---- activations stay at width C in HBM (no pad / slice round trips) ----
    xp = x_blc.reshape(B * L, C)

    itemsize = jnp.dtype(x_blc.dtype).itemsize
    TB = batch_tile if batch_tile is not None else _pick_batch_tile(B, L, itemsize)
    assert B % TB == 0
    rows = TB * L
    fused_slab = (C % 128 == 0) and (K * C <= 512)
    # TODO(synk): add a sequence-length tile (with (K-1)//2 halo) so `rows`
    # stays bounded for very large L instead of growing to TB*L.

    kernel = functools.partial(_resblock_kernel, L=L, K=K, fused_slab=fused_slab)
    vmem_bytes = _vmem_limit_bytes(rows, C, K, itemsize, itemsize, fused_slab)

    def build(const_pipeline_mode):
        ckw = ({} if const_pipeline_mode is None
               else {"pipeline_mode": const_pipeline_mode})
        w_spec = pl.BlockSpec((K, C, C), lambda b: (0, 0, 0), **ckw)
        v_spec = pl.BlockSpec((1, C), lambda b: (0, 0), **ckw)
        return pl.pallas_call(
            kernel,
            out_shape=jax.ShapeDtypeStruct((B * L, C), x_blc.dtype),
            grid_spec=pltpu.PrefetchScalarGridSpec(
                num_scalar_prefetch=0,
                grid=(B // TB,),
                in_specs=[
                    pl.BlockSpec((rows, C), lambda b: (b, 0)),     # x rows
                    w_spec, w_spec,                                # w1, w2
                    v_spec, v_spec, v_spec, v_spec,                # s1, sh1, s2, sh2
                ],
                out_specs=pl.BlockSpec((rows, C), lambda b: (b, 0)),
            ),
            compiler_params=pltpu.CompilerParams(
                dimension_semantics=("parallel",),
                vmem_limit_bytes=vmem_bytes),
        )

    args = (xp, w1, w2, s1, sh1, s2, sh2)
    try:
        # Constant-index weights/scales: single-buffer them (frees VMEM on v7x).
        out = build(pl.Buffered(1))(*args)
    except Exception:
        out = build(None)(*args)            # fallback: default double-buffering

    return out.reshape(B, L, C)


def _reference_jax(x_blc, params, *, kernel_size=3, eps=1e-5):
    """Pure-JAX reference (eval-mode PyTorch semantics) for validation."""
    B, L, C = x_blc.shape
    K = kernel_size
    pad = (K - 1) // 2

    def conv1d(x, w, b):  # x: (B, L, C); w: (C_out, C_in, K)
        xp = jnp.pad(x, ((0, 0), (pad, pad), (0, 0)))
        y = jnp.zeros((B, L, C), jnp.float32)
        for k in range(K):
            y = y + jnp.einsum("blc,oc->blo", xp[:, k:k + L, :], w[:, :, k])
        return y + b[None, None, :]

    def bn(y, g, bta, m, v):
        return (y - m) / jnp.sqrt(v + eps) * g + bta

    y = conv1d(x_blc, params["conv1_w"], params["conv1_b"])
    y = bn(y, params["bn1_gamma"], params["bn1_beta"],
           params["bn1_mean"], params["bn1_var"])
    y = jnp.maximum(y, 0.0)
    y = conv1d(y, params["conv2_w"], params["conv2_b"])
    y = bn(y, params["bn2_gamma"], params["bn2_beta"],
           params["bn2_mean"], params["bn2_var"])
    return jnp.maximum(x_blc + y, 0.0)


if __name__ == "__main__":
    key = jax.random.PRNGKey(0)
    B, C, L, K = 2, 8, 16, 3  # PyTorch input would be (B, C, L)

    ks = jax.random.split(key, 13)
    params = {
        "conv1_w": 0.1 * jax.random.normal(ks[0], (C, C, K), jnp.float32),
        "conv1_b": 0.1 * jax.random.normal(ks[1], (C,), jnp.float32),
        "conv2_w": 0.1 * jax.random.normal(ks[2], (C, C, K), jnp.float32),
        "conv2_b": 0.1 * jax.random.normal(ks[3], (C,), jnp.float32),
        "bn1_gamma": 1.0 + 0.1 * jax.random.normal(ks[4], (C,), jnp.float32),
        "bn1_beta": 0.1 * jax.random.normal(ks[5], (C,), jnp.float32),
        "bn1_mean": 0.1 * jax.random.normal(ks[6], (C,), jnp.float32),
        "bn1_var": 0.5 + jnp.abs(jax.random.normal(ks[7], (C,), jnp.float32)),
        "bn2_gamma": 1.0 + 0.1 * jax.random.normal(ks[8], (C,), jnp.float32),
        "bn2_beta": 0.1 * jax.random.normal(ks[9], (C,), jnp.float32),
        "bn2_mean": 0.1 * jax.random.normal(ks[10], (C,), jnp.float32),
        "bn2_var": 0.5 + jnp.abs(jax.random.normal(ks[11], (C,), jnp.float32)),
    }

    # PyTorch-style input is (B, C, L); the kernel works channels-last (B, L, C).
    x_ncl = jax.random.normal(ks[12], (B, C, L), jnp.float32)
    x_blc = jnp.transpose(x_ncl, (0, 2, 1))

    out_blc = resnet_block_pallas(x_blc, params, kernel_size=K)
    out_blc = jax.block_until_ready(out_blc)

    ref_blc = _reference_jax(x_blc, params, kernel_size=K)
    # bf16 MXU operands with f32 accumulation -> bf16-level tolerance.
    max_err = float(jnp.max(jnp.abs(out_blc - ref_blc)))
    assert jnp.allclose(out_blc, ref_blc, atol=5e-2, rtol=5e-2), (
        f"Pallas output mismatch vs JAX reference; max abs err = {max_err}")

    # Back to PyTorch layout (B, C, L) if a caller needs it.
    _ = jnp.transpose(out_blc, (0, 2, 1))

    print("KERNEL_OK")
</pallas_src>

<mosaic_0001>
module attributes {stable_mosaic.version = 11 : i64} {
  func.func @_resblock_kernel(%arg0: i32, %arg1: memref<16x8xf32, #tpu.memory_space<vmem>>, %arg2: memref<3x8x8xbf16, #tpu.memory_space<vmem>>, %arg3: memref<3x8x8xbf16, #tpu.memory_space<vmem>>, %arg4: memref<1x8xf32, #tpu.memory_space<vmem>>, %arg5: memref<1x8xf32, #tpu.memory_space<vmem>>, %arg6: memref<1x8xf32, #tpu.memory_space<vmem>>, %arg7: memref<1x8xf32, #tpu.memory_space<vmem>>, %arg8: memref<16x8xf32, #tpu.memory_space<vmem>>) attributes {dimension_semantics = [#tpu.dimension_semantics<parallel>], iteration_bounds = array<i64: 2>, scalar_prefetch = 0 : i64, scratch_operands = 0 : i64, tpu.core_type = #tpu.core_type<tc>, window_params = [{transform_indices = @transform_0, window_bounds = array<i64: 16, 8>}, {pipeline_mode = #tpu.pipeline_mode<synchronous>, transform_indices = @transform_1, window_bounds = array<i64: 3, 8, 8>}, {pipeline_mode = #tpu.pipeline_mode<synchronous>, transform_indices = @transform_2, window_bounds = array<i64: 3, 8, 8>}, {pipeline_mode = #tpu.pipeline_mode<synchronous>, transform_indices = @transform_3, window_bounds = array<i64: 1, 8>}, {pipeline_mode = #tpu.pipeline_mode<synchronous>, transform_indices = @transform_4, window_bounds = array<i64: 1, 8>}, {pipeline_mode = #tpu.pipeline_mode<synchronous>, transform_indices = @transform_5, window_bounds = array<i64: 1, 8>}, {pipeline_mode = #tpu.pipeline_mode<synchronous>, transform_indices = @transform_6, window_bounds = array<i64: 1, 8>}, {transform_indices = @transform_7, window_bounds = array<i64: 16, 8>}]} {
    %c0 = arith.constant 0 : index
    %c0_0 = arith.constant 0 : index
    %0 = vector.load %arg1[%c0, %c0_0] : memref<16x8xf32, #tpu.memory_space<vmem>>, vector<16x8xf32>
    %1 = tpu.iota {dimensions = array<i32: 0>} : vector<16x8xi32>
    %c16_i32 = arith.constant 16 : i32
    %c0_i32 = arith.constant 0 : i32
    %2 = arith.cmpi eq, %c16_i32, %c0_i32 : i32
    %c1_i32 = arith.constant 1 : i32
    %3 = arith.select %2, %c1_i32, %c16_i32 : i32
    %4 = vector.broadcast %3 : i32 to vector<16x8xi32>
    %5 = arith.remsi %1, %4 : vector<16x8xi32>
    %c0_i32_1 = arith.constant 0 : i32
    %6 = vector.broadcast %c0_i32_1 : i32 to vector<16x8xi32>
    %7 = arith.cmpi ne, %5, %6 : vector<16x8xi32>
    %c0_i32_2 = arith.constant 0 : i32
    %8 = vector.broadcast %c0_i32_2 : i32 to vector<16x8xi32>
    %9 = arith.cmpi slt, %5, %8 : vector<16x8xi32>
    %c0_i32_3 = arith.constant 0 : i32
    %10 = arith.cmpi slt, %3, %c0_i32_3 : i32
    %11 = vector.broadcast %10 : i1 to vector<16x8xi1>
    %12 = vector.broadcast %11 : vector<16x8xi1> to vector<16x8xi1>
    %13 = arith.xori %9, %12 : vector<16x8xi1>
    %14 = arith.andi %13, %7 : vector<16x8xi1>
    %15 = vector.broadcast %3 : i32 to vector<16x8xi32>
    %16 = arith.addi %5, %15 : vector<16x8xi32>
    %17 = arith.select %14, %16, %5 : vector<16x8xi1>, vector<16x8xi32>
    %c1_i32_4 = arith.constant 1 : i32
    %18 = vector.broadcast %c1_i32_4 : i32 to vector<16x8xi32>
    %19 = arith.cmpi sge, %17, %18 : vector<16x8xi32>
    %c17_i32 = arith.constant 17 : i32
    %20 = vector.broadcast %c17_i32 : i32 to vector<16x8xi32>
    %21 = arith.cmpi slt, %17, %20 : vector<16x8xi32>
    %22 = arith.andi %19, %21 : vector<16x8xi1>
    %c-1_i32 = arith.constant -1 : i32
    %23 = vector.broadcast %c-1_i32 : i32 to vector<16x8xi32>
    %24 = arith.cmpi sge, %17, %23 : vector<16x8xi32>
    %c15_i32 = arith.constant 15 : i32
    %25 = vector.broadcast %c15_i32 : i32 to vector<16x8xi32>
    %26 = arith.cmpi slt, %17, %25 : vector<16x8xi32>
    %27 = arith.andi %24, %26 : vector<16x8xi1>
    %c1_i32_5 = arith.constant 1 : i32
    %28 = tpu.dynamic_rotate %0 by %c1_i32_5 dim 0 : vector<16x8xf32>, i32 -> vector<16x8xf32>
    %29 = arith.truncf %28 : vector<16x8xf32> to vector<16x8xbf16>
    %cst = arith.constant 0.000000e+00 : bf16
    %30 = vector.broadcast %cst : bf16 to vector<16x8xbf16>
    %31 = arith.select %22, %29, %30 : vector<16x8xi1>, vector<16x8xbf16>
    %32 = arith.truncf %0 : vector<16x8xf32> to vector<16x8xbf16>
    %c15_i32_6 = arith.constant 15 : i32
    %33 = tpu.dynamic_rotate %0 by %c15_i32_6 dim 0 : vector<16x8xf32>, i32 -> vector<16x8xf32>
    %34 = arith.truncf %33 : vector<16x8xf32> to vector<16x8xbf16>
    %cst_7 = arith.constant 0.000000e+00 : bf16
    %35 = vector.broadcast %cst_7 : bf16 to vector<16x8xbf16>
    %36 = arith.select %27, %34, %35 : vector<16x8xi1>, vector<16x8xbf16>
    %c0_8 = arith.constant 0 : index
    %c0_9 = arith.constant 0 : index
    %c0_10 = arith.constant 0 : index
    %37 = vector.load %arg2[%c0_8, %c0_9, %c0_10] : memref<3x8x8xbf16, #tpu.memory_space<vmem>>, vector<1x8x8xbf16>
    %38 = vector.shape_cast %37 : vector<1x8x8xbf16> to vector<8x8xbf16>
    %cst_11 = arith.constant dense<0.000000e+00> : vector<16x8xf32>
    %39 = tpu.matmul %31, %38, %cst_11 {dimension_numbers = #tpu.dot_dimension_numbers<[1], [0], [0], [1], [0, 0, 1, 1], [], []>} : vector<16x8xbf16>, vector<8x8xbf16>, vector<16x8xf32> -> vector<16x8xf32>
    %c1 = arith.constant 1 : index
    %c0_12 = arith.constant 0 : index
    %c0_13 = arith.constant 0 : index
    %40 = vector.load %arg2[%c1, %c0_12, %c0_13] : memref<3x8x8xbf16, #tpu.memory_space<vmem>>, vector<1x8x8xbf16>
    %41 = vector.shape_cast %40 : vector<1x8x8xbf16> to vector<8x8xbf16>
    %cst_14 = arith.constant dense<0.000000e+00> : vector<16x8xf32>
    %42 = tpu.matmul %32, %41, %cst_14 {dimension_numbers = #tpu.dot_dimension_numbers<[1], [0], [0], [1], [0, 0, 1, 1], [], []>} : vector<16x8xbf16>, vector<8x8xbf16>, vector<16x8xf32> -> vector<16x8xf32>
    %43 = arith.addf %39, %42 : vector<16x8xf32>
    %c2 = arith.constant 2 : index
    %c0_15 = arith.constant 0 : index
    %c0_16 = arith.constant 0 : index
    %44 = vector.load %arg2[%c2, %c0_15, %c0_16] : memref<3x8x8xbf16, #tpu.memory_space<vmem>>, vector<1x8x8xbf16>
    %45 = vector.shape_cast %44 : vector<1x8x8xbf16> to vector<8x8xbf16>
    %cst_17 = arith.constant dense<0.000000e+00> : vector<16x8xf32>
    %46 = tpu.matmul %36, %45, %cst_17 {dimension_numbers = #tpu.dot_dimension_numbers<[1], [0], [0], [1], [0, 0, 1, 1], [], []>} : vector<16x8xbf16>, vector<8x8xbf16>, vector<16x8xf32> -> vector<16x8xf32>
    %47 = arith.addf %43, %46 : vector<16x8xf32>
    %c0_18 = arith.constant 0 : index
    %c0_19 = arith.constant 0 : index
    %48 = vector.load %arg4[%c0_18, %c0_19] : memref<1x8xf32, #tpu.memory_space<vmem>>, vector<1x8xf32>
    %49 = vector.broadcast %48 : vector<1x8xf32> to vector<16x8xf32>
    %50 = arith.mulf %47, %49 : vector<16x8xf32>
    %c0_20 = arith.constant 0 : index
    %c0_21 = arith.constant 0 : index
    %51 = vector.load %arg5[%c0_20, %c0_21] : memref<1x8xf32, #tpu.memory_space<vmem>>, vector<1x8xf32>
    %52 = vector.broadcast %51 : vector<1x8xf32> to vector<16x8xf32>
    %53 = arith.addf %50, %52 : vector<16x8xf32>
    %cst_22 = arith.constant 0.000000e+00 : f32
    %54 = vector.broadcast %cst_22 : f32 to vector<16x8xf32>
    %55 = arith.maximumf %53, %54 : vector<16x8xf32>
    %c1_i32_23 = arith.constant 1 : i32
    %56 = tpu.dynamic_rotate %55 by %c1_i32_23 dim 0 : vector<16x8xf32>, i32 -> vector<16x8xf32>
    %57 = arith.truncf %56 : vector<16x8xf32> to vector<16x8xbf16>
    %cst_24 = arith.constant 0.000000e+00 : bf16
    %58 = vector.broadcast %cst_24 : bf16 to vector<16x8xbf16>
    %59 = arith.select %22, %57, %58 : vector<16x8xi1>, vector<16x8xbf16>
    %60 = arith.truncf %55 : vector<16x8xf32> to vector<16x8xbf16>
    %c15_i32_25 = arith.constant 15 : i32
    %61 = tpu.dynamic_rotate %55 by %c15_i32_25 dim 0 : vector<16x8xf32>, i32 -> vector<16x8xf32>
    %62 = arith.truncf %61 : vector<16x8xf32> to vector<16x8xbf16>
    %cst_26 = arith.constant 0.000000e+00 : bf16
    %63 = vector.broadcast %cst_26 : bf16 to vector<16x8xbf16>
    %64 = arith.select %27, %62, %63 : vector<16x8xi1>, vector<16x8xbf16>
    %c0_27 = arith.constant 0 : index
    %c0_28 = arith.constant 0 : index
    %c0_29 = arith.constant 0 : index
    %65 = vector.load %arg3[%c0_27, %c0_28, %c0_29] : memref<3x8x8xbf16, #tpu.memory_space<vmem>>, vector<1x8x8xbf16>
    %66 = vector.shape_cast %65 : vector<1x8x8xbf16> to vector<8x8xbf16>
    %cst_30 = arith.constant dense<0.000000e+00> : vector<16x8xf32>
    %67 = tpu.matmul %59, %66, %cst_30 {dimension_numbers = #tpu.dot_dimension_numbers<[1], [0], [0], [1], [0, 0, 1, 1], [], []>} : vector<16x8xbf16>, vector<8x8xbf16>, vector<16x8xf32> -> vector<16x8xf32>
    %c1_31 = arith.constant 1 : index
    %c0_32 = arith.constant 0 : index
    %c0_33 = arith.constant 0 : index
    %68 = vector.load %arg3[%c1_31, %c0_32, %c0_33] : memref<3x8x8xbf16, #tpu.memory_space<vmem>>, vector<1x8x8xbf16>
    %69 = vector.shape_cast %68 : vector<1x8x8xbf16> to vector<8x8xbf16>
    %cst_34 = arith.constant dense<0.000000e+00> : vector<16x8xf32>
    %70 = tpu.matmul %60, %69, %cst_34 {dimension_numbers = #tpu.dot_dimension_numbers<[1], [0], [0], [1], [0, 0, 1, 1], [], []>} : vector<16x8xbf16>, vector<8x8xbf16>, vector<16x8xf32> -> vector<16x8xf32>
    %71 = arith.addf %67, %70 : vector<16x8xf32>
    %c2_35 = arith.constant 2 : index
    %c0_36 = arith.constant 0 : index
    %c0_37 = arith.constant 0 : index
    %72 = vector.load %arg3[%c2_35, %c0_36, %c0_37] : memref<3x8x8xbf16, #tpu.memory_space<vmem>>, vector<1x8x8xbf16>
    %73 = vector.shape_cast %72 : vector<1x8x8xbf16> to vector<8x8xbf16>
    %cst_38 = arith.constant dense<0.000000e+00> : vector<16x8xf32>
    %74 = tpu.matmul %64, %73, %cst_38 {dimension_numbers = #tpu.dot_dimension_numbers<[1], [0], [0], [1], [0, 0, 1, 1], [], []>} : vector<16x8xbf16>, vector<8x8xbf16>, vector<16x8xf32> -> vector<16x8xf32>
    %75 = arith.addf %71, %74 : vector<16x8xf32>
    %c0_39 = arith.constant 0 : index
    %c0_40 = arith.constant 0 : index
    %76 = vector.load %arg6[%c0_39, %c0_40] : memref<1x8xf32, #tpu.memory_space<vmem>>, vector<1x8xf32>
    %77 = vector.broadcast %76 : vector<1x8xf32> to vector<16x8xf32>
    %78 = arith.mulf %75, %77 : vector<16x8xf32>
    %c0_41 = arith.constant 0 : index
    %c0_42 = arith.constant 0 : index
    %79 = vector.load %arg7[%c0_41, %c0_42] : memref<1x8xf32, #tpu.memory_space<vmem>>, vector<1x8xf32>
    %80 = vector.broadcast %79 : vector<1x8xf32> to vector<16x8xf32>
    %81 = arith.addf %78, %80 : vector<16x8xf32>
    %82 = arith.addf %0, %81 : vector<16x8xf32>
    %cst_43 = arith.constant 0.000000e+00 : f32
    %83 = vector.broadcast %cst_43 : f32 to vector<16x8xf32>
    %84 = arith.maximumf %82, %83 : vector<16x8xf32>
    %c0_44 = arith.constant 0 : index
    %c0_45 = arith.constant 0 : index
    %85 = vector.load %arg8[%c0_44, %c0_45] : memref<16x8xf32, #tpu.memory_space<vmem>>, vector<16x8xf32>
    tpu.vector_store %arg8[%c0_44, %c0_45], %84 {strides = array<i32>} : memref<16x8xf32, #tpu.memory_space<vmem>>, vector<16x8xf32>,
    return
  }
  func.func @transform_0(%arg0: i32) -> (i32, i32) {
    %c0_i32 = arith.constant 0 : i32
    %c0_i32_0 = arith.constant 0 : i32
    return %arg0, %c0_i32 : i32, i32
  }
  func.func @transform_1(%arg0: i32) -> (i32, i32, i32) {
    %c0_i32 = arith.constant 0 : i32
    %c0_i32_0 = arith.constant 0 : i32
    %c0_i32_1 = arith.constant 0 : i32
    %c0_i32_2 = arith.constant 0 : i32
    return %c0_i32, %c0_i32_0, %c0_i32_1 : i32, i32, i32
  }
  func.func @transform_2(%arg0: i32) -> (i32, i32, i32) {
    %c0_i32 = arith.constant 0 : i32
    %c0_i32_0 = arith.constant 0 : i32
    %c0_i32_1 = arith.constant 0 : i32
    %c0_i32_2 = arith.constant 0 : i32
    return %c0_i32, %c0_i32_0, %c0_i32_1 : i32, i32, i32
  }
  func.func @transform_3(%arg0: i32) -> (i32, i32) {
    %c0_i32 = arith.constant 0 : i32
    %c0_i32_0 = arith.constant 0 : i32
    %c0_i32_1 = arith.constant 0 : i32
    return %c0_i32, %c0_i32_0 : i32, i32
  }
  func.func @transform_4(%arg0: i32) -> (i32, i32) {
    %c0_i32 = arith.constant 0 : i32
    %c0_i32_0 = arith.constant 0 : i32
    %c0_i32_1 = arith.constant 0 : i32
    return %c0_i32, %c0_i32_0 : i32, i32
  }
  func.func @transform_5(%arg0: i32) -> (i32, i32) {
    %c0_i32 = arith.constant 0 : i32
    %c0_i32_0 = arith.constant 0 : i32
    %c0_i32_1 = arith.constant 0 : i32
    return %c0_i32, %c0_i32_0 : i32, i32
  }
  func.func @transform_6(%arg0: i32) -> (i32, i32) {
    %c0_i32 = arith.constant 0 : i32
    %c0_i32_0 = arith.constant 0 : i32
    %c0_i32_1 = arith.constant 0 : i32
    return %c0_i32, %c0_i32_0 : i32, i32
  }
  func.func @transform_7(%arg0: i32) -> (i32, i32) {
    %c0_i32 = arith.constant 0 : i32
    %c0_i32_0 = arith.constant 0 : i32
    return %arg0, %c0_i32 : i32, i32
  }
}

module attributes {stable_mosaic.version = 11 : i64} {
  func.func @_resblock_kernel(%arg0: i32, %arg1: memref<16x8xf32, #tpu.memory_space<vmem>>, %arg2: memref<3x8x8xbf16, #tpu.memory_space<vmem>>, %arg3: memref<3x8x8xbf16, #tpu.memory_space<vmem>>, %arg4: memref<1x8xf32, #tpu.memory_space<vmem>>, %arg5: memref<1x8xf32, #tpu.memory_space<vmem>>, %arg6: memref<1x8xf32, #tpu.memory_space<vmem>>, %arg7: memref<1x8xf32, #tpu.memory_space<vmem>>, %arg8: memref<16x8xf32, #tpu.memory_space<vmem>>) attributes {dimension_semantics = [#tpu.dimension_semantics<parallel>], iteration_bounds = array<i64: 2>, scalar_prefetch = 0 : i64, scratch_operands = 0 : i64, tpu.core_type = #tpu.core_type<tc>, window_params = [{transform_indices = @transform_0, window_bounds = array<i64: 16, 8>}, {pipeline_mode = #tpu.pipeline_mode<synchronous>, transform_indices = @transform_1, window_bounds = array<i64: 3, 8, 8>}, {pipeline_mode = #tpu.pipeline_mode<synchronous>, transform_indices = @transform_2, window_bounds = array<i64: 3, 8, 8>}, {pipeline_mode = #tpu.pipeline_mode<synchronous>, transform_indices = @transform_3, window_bounds = array<i64: 1, 8>}, {pipeline_mode = #tpu.pipeline_mode<synchronous>, transform_indices = @transform_4, window_bounds = array<i64: 1, 8>}, {pipeline_mode = #tpu.pipeline_mode<synchronous>, transform_indices = @transform_5, window_bounds = array<i64: 1, 8>}, {pipeline_mode = #tpu.pipeline_mode<synchronous>, transform_indices = @transform_6, window_bounds = array<i64: 1, 8>}, {transform_indices = @transform_7, window_bounds = array<i64: 16, 8>}]} {
    %c0 = arith.constant 0 : index
    %c0_0 = arith.constant 0 : index
    %0 = vector.load %arg1[%c0, %c0_0] : memref<16x8xf32, #tpu.memory_space<vmem>>, vector<16x8xf32>
    %1 = tpu.iota {dimensions = array<i32: 0>} : vector<16x8xi32>
    %c16_i32 = arith.constant 16 : i32
    %c0_i32 = arith.constant 0 : i32
    %2 = arith.cmpi eq, %c16_i32, %c0_i32 : i32
    %c1_i32 = arith.constant 1 : i32
    %3 = arith.select %2, %c1_i32, %c16_i32 : i32
    %4 = vector.broadcast %3 : i32 to vector<16x8xi32>
    %5 = arith.remsi %1, %4 : vector<16x8xi32>
    %c0_i32_1 = arith.constant 0 : i32
    %6 = vector.broadcast %c0_i32_1 : i32 to vector<16x8xi32>
    %7 = arith.cmpi ne, %5, %6 : vector<16x8xi32>
    %c0_i32_2 = arith.constant 0 : i32
    %8 = vector.broadcast %c0_i32_2 : i32 to vector<16x8xi32>
    %9 = arith.cmpi slt, %5, %8 : vector<16x8xi32>
    %c0_i32_3 = arith.constant 0 : i32
    %10 = arith.cmpi slt, %3, %c0_i32_3 : i32
    %11 = vector.broadcast %10 : i1 to vector<16x8xi1>
    %12 = vector.broadcast %11 : vector<16x8xi1> to vector<16x8xi1>
    %13 = arith.xori %9, %12 : vector<16x8xi1>
    %14 = arith.andi %13, %7 : vector<16x8xi1>
    %15 = vector.broadcast %3 : i32 to vector<16x8xi32>
    %16 = arith.addi %5, %15 : vector<16x8xi32>
    %17 = arith.select %14, %16, %5 : vector<16x8xi1>, vector<16x8xi32>
    %c1_i32_4 = arith.constant 1 : i32
    %18 = vector.broadcast %c1_i32_4 : i32 to vector<16x8xi32>
    %19 = arith.cmpi sge, %17, %18 : vector<16x8xi32>
    %c17_i32 = arith.constant 17 : i32
    %20 = vector.broadcast %c17_i32 : i32 to vector<16x8xi32>
    %21 = arith.cmpi slt, %17, %20 : vector<16x8xi32>
    %22 = arith.andi %19, %21 : vector<16x8xi1>
    %c-1_i32 = arith.constant -1 : i32
    %23 = vector.broadcast %c-1_i32 : i32 to vector<16x8xi32>
    %24 = arith.cmpi sge, %17, %23 : vector<16x8xi32>
    %c15_i32 = arith.constant 15 : i32
    %25 = vector.broadcast %c15_i32 : i32 to vector<16x8xi32>
    %26 = arith.cmpi slt, %17, %25 : vector<16x8xi32>
    %27 = arith.andi %24, %26 : vector<16x8xi1>
    %c1_i32_5 = arith.constant 1 : i32
    %28 = tpu.dynamic_rotate %0 by %c1_i32_5 dim 0 : vector<16x8xf32>, i32 -> vector<16x8xf32>
    %29 = arith.truncf %28 : vector<16x8xf32> to vector<16x8xbf16>
    %cst = arith.constant 0.000000e+00 : bf16
    %30 = vector.broadcast %cst : bf16 to vector<16x8xbf16>
    %31 = arith.select %22, %29, %30 : vector<16x8xi1>, vector<16x8xbf16>
    %32 = arith.truncf %0 : vector<16x8xf32> to vector<16x8xbf16>
    %c15_i32_6 = arith.constant 15 : i32
    %33 = tpu.dynamic_rotate %0 by %c15_i32_6 dim 0 : vector<16x8xf32>, i32 -> vector<16x8xf32>
    %34 = arith.truncf %33 : vector<16x8xf32> to vector<16x8xbf16>
    %cst_7 = arith.constant 0.000000e+00 : bf16
    %35 = vector.broadcast %cst_7 : bf16 to vector<16x8xbf16>
    %36 = arith.select %27, %34, %35 : vector<16x8xi1>, vector<16x8xbf16>
    %c0_8 = arith.constant 0 : index
    %c0_9 = arith.constant 0 : index
    %c0_10 = arith.constant 0 : index
    %37 = vector.load %arg2[%c0_8, %c0_9, %c0_10] : memref<3x8x8xbf16, #tpu.memory_space<vmem>>, vector<1x8x8xbf16>
    %38 = vector.shape_cast %37 : vector<1x8x8xbf16> to vector<8x8xbf16>
    %cst_11 = arith.constant dense<0.000000e+00> : vector<16x8xf32>
    %39 = tpu.matmul %31, %38, %cst_11 {dimension_numbers = #tpu.dot_dimension_numbers<[1], [0], [0], [1], [0, 0, 1, 1], [], []>} : vector<16x8xbf16>, vector<8x8xbf16>, vector<16x8xf32> -> vector<16x8xf32>
    %c1 = arith.constant 1 : index
    %c0_12 = arith.constant 0 : index
    %c0_13 = arith.constant 0 : index
    %40 = vector.load %arg2[%c1, %c0_12, %c0_13] : memref<3x8x8xbf16, #tpu.memory_space<vmem>>, vector<1x8x8xbf16>
    %41 = vector.shape_cast %40 : vector<1x8x8xbf16> to vector<8x8xbf16>
    %cst_14 = arith.constant dense<0.000000e+00> : vector<16x8xf32>
    %42 = tpu.matmul %32, %41, %cst_14 {dimension_numbers = #tpu.dot_dimension_numbers<[1], [0], [0], [1], [0, 0, 1, 1], [], []>} : vector<16x8xbf16>, vector<8x8xbf16>, vector<16x8xf32> -> vector<16x8xf32>
    %43 = arith.addf %39, %42 : vector<16x8xf32>
    %c2 = arith.constant 2 : index
    %c0_15 = arith.constant 0 : index
    %c0_16 = arith.constant 0 : index
    %44 = vector.load %arg2[%c2, %c0_15, %c0_16] : memref<3x8x8xbf16, #tpu.memory_space<vmem>>, vector<1x8x8xbf16>
    %45 = vector.shape_cast %44 : vector<1x8x8xbf16> to vector<8x8xbf16>
    %cst_17 = arith.constant dense<0.000000e+00> : vector<16x8xf32>
    %46 = tpu.matmul %36, %45, %cst_17 {dimension_numbers = #tpu.dot_dimension_numbers<[1], [0], [0], [1], [0, 0, 1, 1], [], []>} : vector<16x8xbf16>, vector<8x8xbf16>, vector<16x8xf32> -> vector<16x8xf32>
    %47 = arith.addf %43, %46 : vector<16x8xf32>
    %c0_18 = arith.constant 0 : index
    %c0_19 = arith.constant 0 : index
    %48 = vector.load %arg4[%c0_18, %c0_19] : memref<1x8xf32, #tpu.memory_space<vmem>>, vector<1x8xf32>
    %49 = vector.broadcast %48 : vector<1x8xf32> to vector<16x8xf32>
    %50 = arith.mulf %47, %49 : vector<16x8xf32>
    %c0_20 = arith.constant 0 : index
    %c0_21 = arith.constant 0 : index
    %51 = vector.load %arg5[%c0_20, %c0_21] : memref<1x8xf32, #tpu.memory_space<vmem>>, vector<1x8xf32>
    %52 = vector.broadcast %51 : vector<1x8xf32> to vector<16x8xf32>
    %53 = arith.addf %50, %52 : vector<16x8xf32>
    %cst_22 = arith.constant 0.000000e+00 : f32
    %54 = vector.broadcast %cst_22 : f32 to vector<16x8xf32>
    %55 = arith.maximumf %53, %54 : vector<16x8xf32>
    %c1_i32_23 = arith.constant 1 : i32
    %56 = tpu.dynamic_rotate %55 by %c1_i32_23 dim 0 : vector<16x8xf32>, i32 -> vector<16x8xf32>
    %57 = arith.truncf %56 : vector<16x8xf32> to vector<16x8xbf16>
    %cst_24 = arith.constant 0.000000e+00 : bf16
    %58 = vector.broadcast %cst_24 : bf16 to vector<16x8xbf16>
    %59 = arith.select %22, %57, %58 : vector<16x8xi1>, vector<16x8xbf16>
    %60 = arith.truncf %55 : vector<16x8xf32> to vector<16x8xbf16>
    %c15_i32_25 = arith.constant 15 : i32
    %61 = tpu.dynamic_rotate %55 by %c15_i32_25 dim 0 : vector<16x8xf32>, i32 -> vector<16x8xf32>
    %62 = arith.truncf %61 : vector<16x8xf32> to vector<16x8xbf16>
    %cst_26 = arith.constant 0.000000e+00 : bf16
    %63 = vector.broadcast %cst_26 : bf16 to vector<16x8xbf16>
    %64 = arith.select %27, %62, %63 : vector<16x8xi1>, vector<16x8xbf16>
    %c0_27 = arith.constant 0 : index
    %c0_28 = arith.constant 0 : index
    %c0_29 = arith.constant 0 : index
    %65 = vector.load %arg3[%c0_27, %c0_28, %c0_29] : memref<3x8x8xbf16, #tpu.memory_space<vmem>>, vector<1x8x8xbf16>
    %66 = vector.shape_cast %65 : vector<1x8x8xbf16> to vector<8x8xbf16>
    %cst_30 = arith.constant dense<0.000000e+00> : vector<16x8xf32>
    %67 = tpu.matmul %59, %66, %cst_30 {dimension_numbers = #tpu.dot_dimension_numbers<[1], [0], [0], [1], [0, 0, 1, 1], [], []>} : vector<16x8xbf16>, vector<8x8xbf16>, vector<16x8xf32> -> vector<16x8xf32>
    %c1_31 = arith.constant 1 : index
    %c0_32 = arith.constant 0 : index
    %c0_33 = arith.constant 0 : index
    %68 = vector.load %arg3[%c1_31, %c0_32, %c0_33] : memref<3x8x8xbf16, #tpu.memory_space<vmem>>, vector<1x8x8xbf16>
    %69 = vector.shape_cast %68 : vector<1x8x8xbf16> to vector<8x8xbf16>
    %cst_34 = arith.constant dense<0.000000e+00> : vector<16x8xf32>
    %70 = tpu.matmul %60, %69, %cst_34 {dimension_numbers = #tpu.dot_dimension_numbers<[1], [0], [0], [1], [0, 0, 1, 1], [], []>} : vector<16x8xbf16>, vector<8x8xbf16>, vector<16x8xf32> -> vector<16x8xf32>
    %71 = arith.addf %67, %70 : vector<16x8xf32>
    %c2_35 = arith.constant 2 : index
    %c0_36 = arith.constant 0 : index
    %c0_37 = arith.constant 0 : index
    %72 = vector.load %arg3[%c2_35, %c0_36, %c0_37] : memref<3x8x8xbf16, #tpu.memory_space<vmem>>, vector<1x8x8xbf16>
    %73 = vector.shape_cast %72 : vector<1x8x8xbf16> to vector<8x8xbf16>
    %cst_38 = arith.constant dense<0.000000e+00> : vector<16x8xf32>
    %74 = tpu.matmul %64, %73, %cst_38 {dimension_numbers = #tpu.dot_dimension_numbers<[1], [0], [0], [1], [0, 0, 1, 1], [], []>} : vector<16x8xbf16>, vector<8x8xbf16>, vector<16x8xf32> -> vector<16x8xf32>
    %75 = arith.addf %71, %74 : vector<16x8xf32>
    %c0_39 = arith.constant 0 : index
    %c0_40 = arith.constant 0 : index
    %76 = vector.load %arg6[%c0_39, %c0_40] : memref<1x8xf32, #tpu.memory_space<vmem>>, vector<1x8xf32>
    %77 = vector.broadcast %76 : vector<1x8xf32> to vector<16x8xf32>
    %78 = arith.mulf %75, %77 : vector<16x8xf32>
    %c0_41 = arith.constant 0 : index
    %c0_42 = arith.constant 0 : index
    %79 = vector.load %arg7[%c0_41, %c0_42] : memref<1x8xf32, #tpu.memory_space<vmem>>, vector<1x8xf32>
    %80 = vector.broadcast %79 : vector<1x8xf32> to vector<16x8xf32>
    %81 = arith.addf %78, %80 : vector<16x8xf32>
    %82 = arith.addf %0, %81 : vector<16x8xf32>
    %cst_43 = arith.constant 0.000000e+00 : f32
    %83 = vector.broadcast %cst_43 : f32 to vector<16x8xf32>
    %84 = arith.maximumf %82, %83 : vector<16x8xf32>
    %c0_44 = arith.constant 0 : index
    %c0_45 = arith.constant 0 : index
    %85 = vector.load %arg8[%c0_44, %c0_45] : memref<16x8xf32, #tpu.memory_space<vmem>>, vector<16x8xf32>
    tpu.vector_store %arg8[%c0_44, %c0_45], %84 {strides = array<i32>} : memref<16x8xf32, #tpu.memory_space<vmem>>, vector<16x8xf32>,
    return
  }
  func.func @transform_0(%arg0: i32) -> (i32, i32) {
    %c0_i32 = arith.constant 0 : i32
    %c0_i32_0 = arith.constant 0 : i32
    return %arg0, %c0_i32 : i32, i32
  }
  func.func @transform_1(%arg0: i32) -> (i32, i32, i32) {
    %c0_i32 = arith.constant 0 : i32
    %c0_i32_0 = arith.constant 0 : i32
    %c0_i32_1 = arith.constant 0 : i32
    %c0_i32_2 = arith.constant 0 : i32
    return %c0_i32, %c0_i32_0, %c0_i32_1 : i32, i32, i32
  }
  func.func @transform_2(%arg0: i32) -> (i32, i32, i32) {
    %c0_i32 = arith.constant 0 : i32
    %c0_i32_0 = arith.constant 0 : i32
    %c0_i32_1 = arith.constant 0 : i32
    %c0_i32_2 = arith.constant 0 : i32
    return %c0_i32, %c0_i32_0, %c0_i32_1 : i32, i32, i32
  }
  func.func @transform_3(%arg0: i32) -> (i32, i32) {
    %c0_i32 = arith.constant 0 : i32
    %c0_i32_0 = arith.constant 0 : i32
    %c0_i32_1 = arith.constant 0 : i32
    return %c0_i32, %c0_i32_0 : i32, i32
  }
  func.func @transform_4(%arg0: i32) -> (i32, i32) {
    %c0_i32 = arith.constant 0 : i32
    %c0_i32_0 = arith.constant 0 : i32
    %c0_i32_1 = arith.constant 0 : i32
    return %c0_i32, %c0_i32_0 : i32, i32
  }
  func.func @transform_5(%arg0: i32) -> (i32, i32) {
    %c0_i32 = arith.constant 0 : i32
    %c0_i32_0 = arith.constant 0 : i32
    %c0_i32_1 = arith.constant 0 : i32
    return %c0_i32, %c0_i32_0 : i32, i32
  }
  func.func @transform_6(%arg0: i32) -> (i32, i32) {
    %c0_i32 = arith.constant 0 : i32
    %c0_i32_0 = arith.constant 0 : i32
    %c0_i32_1 = arith.constant 0 : i32
    return %c0_i32, %c0_i32_0 : i32, i32
  }
  func.func @transform_7(%arg0: i32) -> (i32, i32) {
    %c0_i32 = arith.constant 0 : i32
    %c0_i32_0 = arith.constant 0 : i32
    return %arg0, %c0_i32 : i32, i32
  }
}

</mosaic_0001>

<llo_original>
// kernel: tpu_custom_call.1
$region0: #{tpu_custom_call.1}
  #allocation0 [shape = 'u32[]', space=smem, size = 0x4, offset = 0x4, fixed_abs, tag = 'smem constant byte address 0x4 - core index']
  #allocation1 [shape = 'u32[144,128]{1,0:T(1,128)}', space=vmem, size = 0x12000, scoped, tag = 'internal scratch']
  %s0 = inlined_call_operand.vmem [shape: f32[32,8], index: 0, kind: input, shape index: {}]
  %s1 = inlined_call_operand.vmem [shape: bf16[3,8,8], index: 1, kind: input, shape index: {}]
  %s2 = inlined_call_operand.vmem [shape: bf16[3,8,8], index: 2, kind: input, shape index: {}]
  %s3 = inlined_call_operand.vmem [shape: f32[1,8], index: 3, kind: input, shape index: {}]
  %s4 = inlined_call_operand.vmem [shape: f32[1,8], index: 4, kind: input, shape index: {}]
  %s5 = inlined_call_operand.vmem [shape: f32[1,8], index: 5, kind: input, shape index: {}]
  %s6 = inlined_call_operand.vmem [shape: f32[1,8], index: 6, kind: input, shape index: {}]
  %s7 = inlined_call_operand.vmem [shape: f32[32,8], index: 7, kind: output, shape index: {}]
  %s8 = sld [smem:[#allocation0]]
  $region61: #{tpu_custom_call.1} parent=0
    _
  %s10 = ssub.s32 1, %s8
  %s11 = scalar_select 0, %s10, %s8
  loop: start=0, step=1, limit=4
  $region2: #{tpu_custom_call.1} parent=0 // loop_pre_header
    _
  $region3: #{tpu_custom_call.1} parent=0 // loop_header
    %s13 = sphi 0, %s17
    %p14 = scmp.ge.s32.totalorder %s13, 4
    %s23 = sphi 0, %s25
    %s26 = sphi 0, %s23
    %s27 = sphi 0, %s26
    %s43 = sphi 0, %s27
    %s47 = sphi 0, %s47
    %s49 = sphi 0, %s47
    %s50 = sphi 0, %s49
    %s64 = sphi 0, %s50
    %s68 = sphi 0, %s68
    %s70 = sphi 0, %s68
    %s71 = sphi 0, %s70
    %s85 = sphi 0, %s71
    %s89 = sphi 0, %s89
    %s91 = sphi 0, %s89
    %s92 = sphi 0, %s91
    %s106 = sphi 0, %s92
    %s110 = sphi 0, %s110
    %s112 = sphi 0, %s110
    %s113 = sphi 0, %s112
    %s127 = sphi 0, %s113
    %s131 = sphi 0, %s131
    %s133 = sphi 0, %s131
    %s134 = sphi 0, %s133
    %s148 = sphi 0, %s134
    %s152 = sphi 0, %s152
    %s154 = sphi 0, %s152
    %s155 = sphi 0, %s154
    %s169 = sphi 0, %s155
    %s175 = sphi 0, %s177
    %s178 = sphi 0, %s175
    %s179 = sphi 0, %s178
    %s195 = sphi 0, %s179
  $region4: #{tpu_custom_call.1} parent=0 // loop_header_branch
    %16 = sbr.rel (%p14) target = $region8
  $region5: #{tpu_custom_call.1} parent=0 // loop_body
    %s18 = ssub.s32 %s13, 1
    %s19 = ssub.s32 %s13, 2
    %s20 = sadd.s32 %s13, 1
    %s21 = ssub.s32 %s13, %s20
    %p22 = scmp.eq.s32.totalorder %s21, 0
    %s24 = sadd.s32 %s23, 1
    %s25 = scalar_select %p22, %s23, %s24
    %p28 = pneg %p22
    %p29 = scmp.eq.s32.totalorder %s13, 1
    %p30 = por %p28, %p29
    %p31 = scmp.ne.s32.totalorder %s23, %s26
    %p32 = scmp.eq.s32.totalorder %s13, 0
    %p33 = por %p31, %p32
    %p34 = scmp.ne.s32.totalorder %s23, %s26
    %p35 = scmp.eq.s32.totalorder %s18, 1
    %p36 = por %p34, %p35
    %p37 = scmp.ne.s32.totalorder %s26, %s27
    %p38 = scmp.eq.s32.totalorder %s18, 0
    %p39 = por %p37, %p38
    %p40 = scmp.ne.s32.totalorder %s26, %s27
    %p41 = scmp.eq.s32.totalorder %s19, 1
    %p42 = por %p40, %p41
    %p44 = scmp.ne.s32.totalorder %s27, %s43
    %p45 = scmp.eq.s32.totalorder %s19, 0
    %p46 = por %p44, %p45
    %s48 = sadd.s32 %s47, 1
    %p51 = scmp.eq.s32.totalorder %s13, 1
    %p52 = scmp.ne.s32.totalorder %s47, %s49
    %p53 = scmp.eq.s32.totalorder %s13, 0
    %p54 = por %p52, %p53
    %p55 = scmp.ne.s32.totalorder %s47, %s49
    %p56 = scmp.eq.s32.totalorder %s18, 1
    %p57 = por %p55, %p56
    %p58 = scmp.ne.s32.totalorder %s49, %s50
    %p59 = scmp.eq.s32.totalorder %s18, 0
    %p60 = por %p58, %p59
    %p61 = scmp.ne.s32.totalorder %s49, %s50
    %p62 = scmp.eq.s32.totalorder %s19, 1
    %p63 = por %p61, %p62
    %p65 = scmp.ne.s32.totalorder %s50, %s64
    %p66 = scmp.eq.s32.totalorder %s19, 0
    %p67 = por %p65, %p66
    %s69 = sadd.s32 %s68, 1
    %p72 = scmp.eq.s32.totalorder %s13, 1
    %p73 = scmp.ne.s32.totalorder %s68, %s70
    %p74 = scmp.eq.s32.totalorder %s13, 0
    %p75 = por %p73, %p74
    %p76 = scmp.ne.s32.totalorder %s68, %s70
    %p77 = scmp.eq.s32.totalorder %s18, 1
    %p78 = por %p76, %p77
    %p79 = scmp.ne.s32.totalorder %s70, %s71
    %p80 = scmp.eq.s32.totalorder %s18, 0
    %p81 = por %p79, %p80
    %p82 = scmp.ne.s32.totalorder %s70, %s71
    %p83 = scmp.eq.s32.totalorder %s19, 1
    %p84 = por %p82, %p83
    %p86 = scmp.ne.s32.totalorder %s71, %s85
    %p87 = scmp.eq.s32.totalorder %s19, 0
    %p88 = por %p86, %p87
    %s90 = sadd.s32 %s89, 1
    %p93 = scmp.eq.s32.totalorder %s13, 1
    %p94 = scmp.ne.s32.totalorder %s89, %s91
    %p95 = scmp.eq.s32.totalorder %s13, 0
    %p96 = por %p94, %p95
    %p97 = scmp.ne.s32.totalorder %s89, %s91
    %p98 = scmp.eq.s32.totalorder %s18, 1
    %p99 = por %p97, %p98
    %p100 = scmp.ne.s32.totalorder %s91, %s92
    %p101 = scmp.eq.s32.totalorder %s18, 0
    %p102 = por %p100, %p101
    %p103 = scmp.ne.s32.totalorder %s91, %s92
    %p104 = scmp.eq.s32.totalorder %s19, 1
    %p105 = por %p103, %p104
    %p107 = scmp.ne.s32.totalorder %s92, %s106
    %p108 = scmp.eq.s32.totalorder %s19, 0
    %p109 = por %p107, %p108
    %s111 = sadd.s32 %s110, 1
    %p114 = scmp.eq.s32.totalorder %s13, 1
    %p115 = scmp.ne.s32.totalorder %s110, %s112
    %p116 = scmp.eq.s32.totalorder %s13, 0
    %p117 = por %p115, %p116
    %p118 = scmp.ne.s32.totalorder %s110, %s112
    %p119 = scmp.eq.s32.totalorder %s18, 1
    %p120 = por %p118, %p119
    %p121 = scmp.ne.s32.totalorder %s112, %s113
    %p122 = scmp.eq.s32.totalorder %s18, 0
    %p123 = por %p121, %p122
    %p124 = scmp.ne.s32.totalorder %s112, %s113
    %p125 = scmp.eq.s32.totalorder %s19, 1
    %p126 = por %p124, %p125
    %p128 = scmp.ne.s32.totalorder %s113, %s127
    %p129 = scmp.eq.s32.totalorder %s19, 0
    %p130 = por %p128, %p129
    %s132 = sadd.s32 %s131, 1
    %p135 = scmp.eq.s32.totalorder %s13, 1
    %p136 = scmp.ne.s32.totalorder %s131, %s133
    %p137 = scmp.eq.s32.totalorder %s13, 0
    %p138 = por %p136, %p137
    %p139 = scmp.ne.s32.totalorder %s131, %s133
    %p140 = scmp.eq.s32.totalorder %s18, 1
    %p141 = por %p139, %p140
    %p142 = scmp.ne.s32.totalorder %s133, %s134
    %p143 = scmp.eq.s32.totalorder %s18, 0
    %p144 = por %p142, %p143
    %p145 = scmp.ne.s32.totalorder %s133, %s134
    %p146 = scmp.eq.s32.totalorder %s19, 1
    %p147 = por %p145, %p146
    %p149 = scmp.ne.s32.totalorder %s134, %s148
    %p150 = scmp.eq.s32.totalorder %s19, 0
    %p151 = por %p149, %p150
    %s153 = sadd.s32 %s152, 1
    %p156 = scmp.eq.s32.totalorder %s13, 1
    %p157 = scmp.ne.s32.totalorder %s152, %s154
    %p158 = scmp.eq.s32.totalorder %s13, 0
    %p159 = por %p157, %p158
    %p160 = scmp.ne.s32.totalorder %s152, %s154
    %p161 = scmp.eq.s32.totalorder %s18, 1
    %p162 = por %p160, %p161
    %p163 = scmp.ne.s32.totalorder %s154, %s155
    %p164 = scmp.eq.s32.totalorder %s18, 0
    %p165 = por %p163, %p164
    %p166 = scmp.ne.s32.totalorder %s154, %s155
    %p167 = scmp.eq.s32.totalorder %s19, 1
    %p168 = por %p166, %p167
    %p170 = scmp.ne.s32.totalorder %s155, %s169
    %p171 = scmp.eq.s32.totalorder %s19, 0
    %p172 = por %p170, %p171
    %s173 = ssub.s32 %s13, %s20
    %p174 = scmp.eq.s32.totalorder %s173, 0
    %s176 = sadd.s32 %s175, 1
    %s177 = scalar_select %p174, %s175, %s176
    %p180 = pneg %p174
    %p181 = scmp.eq.s32.totalorder %s13, 1
    %p182 = por %p180, %p181
    %p183 = scmp.ne.s32.totalorder %s175, %s178
    %p184 = scmp.eq.s32.totalorder %s13, 0
    %p185 = por %p183, %p184
    %p186 = scmp.ne.s32.totalorder %s175, %s178
    %p187 = scmp.eq.s32.totalorder %s18, 1
    %p188 = por %p186, %p187
    %p189 = scmp.ne.s32.totalorder %s178, %s179
    %p190 = scmp.eq.s32.totalorder %s18, 0
    %p191 = por %p189, %p190
    %p192 = scmp.ne.s32.totalorder %s178, %s179
    %p193 = scmp.eq.s32.totalorder %s19, 1
    %p194 = por %p192, %p193
    %p196 = scmp.ne.s32.totalorder %s179, %s195
    %p197 = scmp.eq.s32.totalorder %s19, 0
    %p198 = por %p196, %p197
    %p199 = scmp.le.s32.totalorder 1, %s13
    %p200 = scmp.lt.s32.totalorder %s13, 3
    %p201 = pnand %p199, %p200
    %p202 = pneg %p201
    // Predicated region
    $region9: #{tpu_custom_call.1} parent=5 // pred_check
      _
    $region10: #{tpu_custom_call.1} parent=5 // pred_check_branch
      %204 = sbr.rel (%p201) target = $region12
    $region11: #{tpu_custom_call.1} parent=5 // pred_region
      %s205 = ssub.s32 %s13, 1
      // Predicated region
      $region13: #{tpu_custom_call.1} parent=11 // pred_check
        %p206 = pneg %p60
      $region14: #{tpu_custom_call.1} parent=11 // pred_check_branch
        %208 = sbr.rel (%p206) target = $region16
      $region15: #{tpu_custom_call.1} parent=11 // pred_region
        _
      $region16: #{tpu_custom_call.1} parent=11 // pred_fallthru
        _
      // Predicated region
      $region17: #{tpu_custom_call.1} parent=11 // pred_check
        %p209 = pneg %p81
      $region18: #{tpu_custom_call.1} parent=11 // pred_check_branch
        %211 = sbr.rel (%p209) target = $region20
      $region19: #{tpu_custom_call.1} parent=11 // pred_region
        _
      $region20: #{tpu_custom_call.1} parent=11 // pred_fallthru
        _
      // Predicated region
      $region21: #{tpu_custom_call.1} parent=11 // pred_check
        %p212 = pneg %p102
      $region22: #{tpu_custom_call.1} parent=11 // pred_check_branch
        %214 = sbr.rel (%p212) target = $region24
      $region23: #{tpu_custom_call.1} parent=11 // pred_region
        _
      $region24: #{tpu_custom_call.1} parent=11 // pred_fallthru
        _
      // Predicated region
      $region25: #{tpu_custom_call.1} parent=11 // pred_check
        %p215 = pneg %p123
      $region26: #{tpu_custom_call.1} parent=11 // pred_check_branch
        %217 = sbr.rel (%p215) target = $region28
      $region27: #{tpu_custom_call.1} parent=11 // pred_region
        _
      $region28: #{tpu_custom_call.1} parent=11 // pred_fallthru
        _
      // Predicated region
      $region29: #{tpu_custom_call.1} parent=11 // pred_check
        %p218 = pneg %p144
      $region30: #{tpu_custom_call.1} parent=11 // pred_check_branch
        %220 = sbr.rel (%p218) target = $region32
      $region31: #{tpu_custom_call.1} parent=11 // pred_region
        _
      $region32: #{tpu_custom_call.1} parent=11 // pred_fallthru
        _
      // Predicated region
      $region33: #{tpu_custom_call.1} parent=11 // pred_check
        %p221 = pneg %p165
      $region34: #{tpu_custom_call.1} parent=11 // pred_check_branch
        %223 = sbr.rel (%p221) target = $region36
      $region35: #{tpu_custom_call.1} parent=11 // pred_region
        _
      $region36: #{tpu_custom_call.1} parent=11 // pred_fallthru
        _
    $region12: #{tpu_custom_call.1} parent=5 // pred_fallthru
      _
    %p224 = scmp.lt.s32.totalorder %s13, 2
    // Predicated region
    $region37: #{tpu_custom_call.1} parent=5 // pred_check
      %p225 = pneg %p224
    $region38: #{tpu_custom_call.1} parent=5 // pred_check_branch
      %227 = sbr.rel (%p225) target = $region40
    $region39: #{tpu_custom_call.1} parent=5 // pred_region
      // Predicated region
      $region41: #{tpu_custom_call.1} parent=39 // pred_check
        %p228 = pneg %p33
      $region42: #{tpu_custom_call.1} parent=39 // pred_check_branch
        %230 = sbr.rel (%p228) target = $region44
      $region43: #{tpu_custom_call.1} parent=39 // pred_region
        %s231 = smul.u32 2, %s13
        %p232 = scmp.lt.s32.totalorder %s231, 3
        %s233 = scalar_select %p232, %s231, 3
        %s234 = smul.addr %s233, 8
        %s235 = scalar_lea.vmem %s0, %s234
        %s236 = smul.u32 2, %s13
      $region44: #{tpu_custom_call.1} parent=39 // pred_fallthru
        _
    $region40: #{tpu_custom_call.1} parent=5 // pred_fallthru
      _
    %p237 = scmp.le.s32.totalorder 1, %s13
    %p238 = scmp.lt.s32.totalorder %s13, 3
    %p239 = pnand %p237, %p238
    %p240 = pneg %p239
    // Predicated region
    $region45: #{tpu_custom_call.1} parent=5 // pred_check
      _
    $region46: #{tpu_custom_call.1} parent=5 // pred_check_branch
      %242 = sbr.rel (%p239) target = $region48
    $region47: #{tpu_custom_call.1} parent=5 // pred_region
      %s243 = ssub.s32 %s13, 1
      %s244 = smul.u32 2, %s18
      %p245 = scmp.lt.s32.totalorder %s244, 3
      %s246 = scalar_select %p245, %s244, 3
      %s247 = smul.addr %s246, 8
      %s248 = scalar_lea.vmem %s0, %s247
      %p249 = pneg %p39
      %p250 = pneg %p36
      %p251 = pneg %p60
      %p252 = pneg %p57
      %p253 = pneg %p81
      %p254 = pneg %p78
      %p255 = pneg %p102
      %p256 = pneg %p99
      %p257 = pneg %p123
      %p258 = pneg %p120
      %p259 = pneg %p144
      %p260 = pneg %p141
      %p261 = pneg %p165
      %p262 = pneg %p162
      %p263 = pneg %p191
      %p264 = pneg %p188
      %s265 = smul.u32 2, %s18
      %p266 = scmp.lt.s32.totalorder %s265, 3
      %s267 = scalar_select %p266, %s265, 3
      %s268 = smul.addr %s267, 8
      %s269 = scalar_lea.vmem %s7, %s268
      %s270 = smul.u32 2, %s18
      %p271 = scmp.lt.s32.totalorder %s270, 3
      %s272 = scalar_select %p271, %s270, 3
      %s273 = smul.addr %s272, 8
      %s274 = scalar_lea.vmem %s0, %s273
      %s275 = smul.u32 2, %s18
      %s276 = smul.u32 2, %s18
      %p277 = scmp.lt.s32.totalorder %s276, 3
      %s278 = scalar_select %p277, %s276, 3
      %s279 = smul.addr %s278, 8
      %s280 = scalar_lea.vmem %s7, %s279
      %s281 = smul.u32 2, %s18
      %v285 = vld [vmem:[%s274] sm:$0xff]
      %v286 = vld [vmem:[%s274 + $0x8] sm:$0xff]
      %v287 = vlaneseq
      %v288 = vshrl.u32 %v287, 7
      %v289 = vadd.s32 %v288, 8
      %vm290 = vcmp.lt.s32.totalorder %v288, 0
      %v291 = vsub.s32 0, %v288
      %v292 = vsel %vm290, %v291, %v288
      %v293 = vshrl.u32 %v292, 4
      %v294 = vand.u32 %v292, 15
      %v295 = vsub.s32 0, %v294
      %v296 = vsel %vm290, %v295, %v294
      %vm297 = vcmp.lt.s32.totalorder %v289, 0
      %v298 = vsub.s32 0, %v289
      %v299 = vsel %vm297, %v298, %v289
      %v300 = vshrl.u32 %v299, 4
      %v301 = vand.u32 %v299, 15
      %v302 = vsub.s32 0, %v301
      %v303 = vsel %vm297, %v302, %v301
      %vm304 = vcmp.ne.s32.totalorder %v296, 0
      %vm305 = vcmp.ne.s32.totalorder %v303, 0
      %vm306 = vcmp.lt.s32.totalorder %v296, 0
      %vm307 = vcmp.lt.s32.totalorder %v303, 0
      %vm308 = vmand %vm306, %vm304
      %vm309 = vmand %vm307, %vm305
      %v310 = vadd.s32 %v296, 16
      %v311 = vadd.s32 %v303, 16
      %v312 = vsel %vm308, %v310, %v296
      %v313 = vsel %vm309, %v311, %v303
      %vm314 = vcmp.ge.s32.totalorder %v312, 1
      %vm315 = vcmp.ge.s32.totalorder %v313, 1
      %vm316 = vcmp.lt.s32.totalorder %v312, 17
      %vm317 = vcmp.lt.s32.totalorder %v313, 17
      %vm318 = vmand %vm314, %vm316
      %vm319 = vmand %vm315, %vm317
      %vm320 = vcmp.ge.s32.totalorder %v312, 4294967295
      %vm321 = vcmp.ge.s32.totalorder %v313, 4294967295
      %vm322 = vcmp.lt.s32.totalorder %v312, 15
      %vm323 = vcmp.lt.s32.totalorder %v313, 15
      %vm324 = vmand %vm320, %vm322
      %vm325 = vmand %vm321, %vm323
      %v326 = vrot.slane %v285, 7
      %v327 = vrot.slane %v286, 7
      %vm328 = vcmp.lt.s32.totalorder %v288, 1
      %v329 = vsel %vm328, %v326, %v327
      %v330 = vsel %vm328, %v327, %v326
      %v331 = vpack.c.bf16 %v329, %v330
      %vm332 = vmpackc.low %vm318, %vm318
      %vm333 = vmpackc.low %vm319, %vm319
      %v334 = vsel %vm332, 65537, 0
      %v335 = vsel %vm333, 65537, 0
      %v336 = vunpack.c.l.b16 %v334
      %v337 = vunpack.c.l.b16 %v335
      %v338 = vpack.c.b16 %v337, %v336
      %vm339 = vcmp.ne.s16.totalorder %v338, 0
      %v340 = vsel %vm339, %v331, 0
      %v341 = vpack.c.bf16 %v286, %v285
      %v342 = vrot.slane %v285, 1
      %v343 = vrot.slane %v286, 1
      %vm344 = vcmp.lt.s32.totalorder %v288, 7
      %v345 = vsel %vm344, %v342, %v343
      %v346 = vsel %vm344, %v343, %v342
      %v347 = vpack.c.bf16 %v346, %v345
      %vm348 = vmpackc.low %vm324, %vm324
      %vm349 = vmpackc.low %vm325, %vm325
      %v350 = vsel %vm348, 65537, 0
      %v351 = vsel %vm349, 65537, 0
      %v352 = vunpack.c.l.b16 %v350
      %v353 = vunpack.c.l.b16 %v351
      %v354 = vpack.c.b16 %v353, %v352
      %vm355 = vcmp.ne.s16.totalorder %v354, 0
      %v356 = vsel %vm355, %v347, 0
      %v357 = vld [vmem:[%s1] sm:$0xf]
      %s358 = scalar_lea.vmem %s1, 4
      %v359 = vld [vmem:[%s358] sm:$0xf]
      %vm360 = vcmask 64512
      %v362 = vsel %vm360, %v341, 0
      %vm364 = vcmask 1043456
      %v366 = vsel %vm364, %v359, 0
      %368 = vmatprep.subr.bf16.mxu0 0
      %369 = vmatpush1.bf16.msra.mxu0 0
      %370 = vmatprep.subr.bf16.mxu0 0
      %371 = vmatpush1.bf16.msra.mxu0 0
      %372 = vmatprep.subr.bf16.mxu0 0
      %373 = vmatpush1.bf16.msra.mxu0 0
      %374 = vmatprep.subr.bf16.mxu0 0
      %375 = vmatpush1.bf16.msra.mxu0 0
      %376 = vmatprep.subr.bf16.mxu0 0
      %377 = vmatpush1.bf16.msra.mxu0 0
      %378 = vmatprep.subr.bf16.mxu0 0
      %379 = vmatpush1.bf16.msra.mxu0 0
      %380 = vmatprep.subr.bf16.mxu0 0
      %381 = vmatpush1.bf16.msra.mxu0 0
      %382 = vmatprep.subr.bf16.mxu0 0
      %383 = vmatpush1.bf16.msra.mxu0 %v366
      %384 = vmatprep.subr.bf16.mxu0 0
      %385 = vmatpush2.bf16.msra.mxu0 0
      %386 = vmatprep.subr.bf16.mxu0 0
      %387 = vmatpush2.bf16.msra.mxu0 0
      %388 = vmatprep.subr.bf16.mxu0 0
      %389 = vmatpush2.bf16.msra.mxu0 0
      %390 = vmatprep.subr.bf16.mxu0 0
      %391 = vmatpush2.bf16.msra.mxu0 0
      %392 = vmatprep.subr.bf16.mxu0 0
      %393 = vmatpush2.bf16.msra.mxu0 0
      %394 = vmatprep.subr.bf16.mxu0 0
      %395 = vmatpush2.bf16.msra.mxu0 0
      %396 = vmatprep.subr.bf16.mxu0 0
      %397 = vmatpush2.bf16.msra.mxu0 0
      %398 = vmatprep.subr.bf16.mxu0 0
      %399 = vmatpush2.bf16.msra.mxu0 0
      %400 = vmatprep.mubr.bf16.mxu0 0
      %401 = vmatmul.mubr.bf16.gmra.mxu0 %v362
      %v402 = vpop.f32.mrf.mxu0
      %v403 = vadd.f32 0.0, %v402
      %v404 = vpop.f32.mrf.mxu0
      %v405 = vpop.f32.mrf.mxu0
      %v406 = vadd.f32 0.0, %v405
      %v407 = vpop.f32.mrf.mxu0
      %408 = vdwg.mxu0
      %v410 = vsel %vm360, %v340, 0
      %v413 = vsel %vm364, %v357, 0
      %415 = vmatprep.subr.bf16.mxu0 0
      %416 = vmatpush1.bf16.msra.mxu0 0
      %417 = vmatprep.subr.bf16.mxu0 0
      %418 = vmatpush1.bf16.msra.mxu0 0
      %419 = vmatprep.subr.bf16.mxu0 0
      %420 = vmatpush1.bf16.msra.mxu0 0
      %421 = vmatprep.subr.bf16.mxu0 0
      %422 = vmatpush1.bf16.msra.mxu0 0
      %423 = vmatprep.subr.bf16.mxu0 0
      %424 = vmatpush1.bf16.msra.mxu0 0
      %425 = vmatprep.subr.bf16.mxu0 0
      %426 = vmatpush1.bf16.msra.mxu0 0
      %427 = vmatprep.subr.bf16.mxu0 0
      %428 = vmatpush1.bf16.msra.mxu0 0
      %429 = vmatprep.subr.bf16.mxu0 0
      %430 = vmatpush1.bf16.msra.mxu0 %v413
      %431 = vmatprep.subr.bf16.mxu0 0
      %432 = vmatpush2.bf16.msra.mxu0 0
      %433 = vmatprep.subr.bf16.mxu0 0
      %434 = vmatpush2.bf16.msra.mxu0 0
      %435 = vmatprep.subr.bf16.mxu0 0
      %436 = vmatpush2.bf16.msra.mxu0 0
      %437 = vmatprep.subr.bf16.mxu0 0
      %438 = vmatpush2.bf16.msra.mxu0 0
      %439 = vmatprep.subr.bf16.mxu0 0
      %440 = vmatpush2.bf16.msra.mxu0 0
      %441 = vmatprep.subr.bf16.mxu0 0
      %442 = vmatpush2.bf16.msra.mxu0 0
      %443 = vmatprep.subr.bf16.mxu0 0
      %444 = vmatpush2.bf16.msra.mxu0 0
      %445 = vmatprep.subr.bf16.mxu0 0
      %446 = vmatpush2.bf16.msra.mxu0 0
      %447 = vmatprep.mubr.bf16.mxu0 0
      %448 = vmatmul.mubr.bf16.gmra.mxu0 %v410
      %v449 = vpop.f32.mrf.mxu0
      %v450 = vadd.f32 %v403, %v449
      %v451 = vpop.f32.mrf.mxu0
      %v452 = vpop.f32.mrf.mxu0
      %v453 = vadd.f32 %v406, %v452
      %v454 = vpop.f32.mrf.mxu0
      %455 = vdwg.mxu0
      %s456 = scalar_lea.vmem %s1, 8
      %v457 = vld [vmem:[%s456] sm:$0xf]
      %v459 = vsel %vm360, %v356, 0
      %v462 = vsel %vm364, %v457, 0
      %464 = vmatprep.subr.bf16.mxu0 0
      %465 = vmatpush1.bf16.msra.mxu0 0
      %466 = vmatprep.subr.bf16.mxu0 0
      %467 = vmatpush1.bf16.msra.mxu0 0
      %468 = vmatprep.subr.bf16.mxu0 0
      %469 = vmatpush1.bf16.msra.mxu0 0
      %470 = vmatprep.subr.bf16.mxu0 0
      %471 = vmatpush1.bf16.msra.mxu0 0
      %472 = vmatprep.subr.bf16.mxu0 0
      %473 = vmatpush1.bf16.msra.mxu0 0
      %474 = vmatprep.subr.bf16.mxu0 0
      %475 = vmatpush1.bf16.msra.mxu0 0
      %476 = vmatprep.subr.bf16.mxu0 0
      %477 = vmatpush1.bf16.msra.mxu0 0
      %478 = vmatprep.subr.bf16.mxu0 0
      %479 = vmatpush1.bf16.msra.mxu0 %v462
      %480 = vmatprep.subr.bf16.mxu0 0
      %481 = vmatpush2.bf16.msra.mxu0 0
      %482 = vmatprep.subr.bf16.mxu0 0
      %483 = vmatpush2.bf16.msra.mxu0 0
      %484 = vmatprep.subr.bf16.mxu0 0
      %485 = vmatpush2.bf16.msra.mxu0 0
      %486 = vmatprep.subr.bf16.mxu0 0
      %487 = vmatpush2.bf16.msra.mxu0 0
      %488 = vmatprep.subr.bf16.mxu0 0
      %489 = vmatpush2.bf16.msra.mxu0 0
      %490 = vmatprep.subr.bf16.mxu0 0
      %491 = vmatpush2.bf16.msra.mxu0 0
      %492 = vmatprep.subr.bf16.mxu0 0
      %493 = vmatpush2.bf16.msra.mxu0 0
      %494 = vmatprep.subr.bf16.mxu0 0
      %495 = vmatpush2.bf16.msra.mxu0 0
      %496 = vmatprep.mubr.bf16.mxu0 0
      %497 = vmatmul.mubr.bf16.gmra.mxu0 %v459
      %v498 = vpop.f32.mrf.mxu0
      %v499 = vadd.f32 0.0, %v498
      %v500 = vpop.f32.mrf.mxu0
      %v501 = vpop.f32.mrf.mxu0
      %v502 = vadd.f32 0.0, %v501
      %v503 = vpop.f32.mrf.mxu0
      %504 = vdwg.mxu0
      %v505 = vadd.f32 %v450, %v499
      %v506 = vadd.f32 %v453, %v502
      %v507 = vld [vmem:[%s3] sm:$0x1]
      %v509 = vlaneseq
      %v510 = vshrl.u32 %v509, 7
      %v511 = vsub.s32 0, %v510
      %v512 = vrot.slane %v507, %v511
      %v514 = vmul.f32 %v505, %v512
      %v515 = vmul.f32 %v506, %v512
      %v516 = vld [vmem:[%s4] sm:$0x1]
      %v518 = vlaneseq
      %v519 = vshrl.u32 %v518, 7
      %v520 = vsub.s32 0, %v519
      %v521 = vrot.slane %v516, %v520
      %v523 = vadd.f32 %v514, %v521
      %v524 = vadd.f32 %v515, %v521
      %v525 = vmax.f32 %v523, 0.0
      %v526 = vmax.f32 %v524, 0.0
      %v527 = vrot.slane %v525, 7
      %v528 = vrot.slane %v526, 7
      %v529 = vsel %vm328, %v527, %v528
      %v530 = vsel %vm328, %v528, %v527
      %v531 = vpack.c.bf16 %v529, %v530
      %v532 = vsel %vm339, %v531, 0
      %v533 = vpack.c.bf16 %v526, %v525
      %v534 = vrot.slane %v525, 1
      %v535 = vrot.slane %v526, 1
      %v536 = vsel %vm344, %v534, %v535
      %v537 = vsel %vm344, %v535, %v534
      %v538 = vpack.c.bf16 %v537, %v536
      %v539 = vsel %vm355, %v538, 0
      %v540 = vld [vmem:[%s2] sm:$0xf]
      %s541 = scalar_lea.vmem %s2, 4
      %v542 = vld [vmem:[%s541] sm:$0xf]
      %v544 = vsel %vm360, %v533, 0
      %v547 = vsel %vm364, %v542, 0
      %549 = vmatprep.subr.bf16.mxu0 0
      %550 = vmatpush1.bf16.msra.mxu0 0
      %551 = vmatprep.subr.bf16.mxu0 0
      %552 = vmatpush1.bf16.msra.mxu0 0
      %553 = vmatprep.subr.bf16.mxu0 0
      %554 = vmatpush1.bf16.msra.mxu0 0
      %555 = vmatprep.subr.bf16.mxu0 0
      %556 = vmatpush1.bf16.msra.mxu0 0
      %557 = vmatprep.subr.bf16.mxu0 0
      %558 = vmatpush1.bf16.msra.mxu0 0
      %559 = vmatprep.subr.bf16.mxu0 0
      %560 = vmatpush1.bf16.msra.mxu0 0
      %561 = vmatprep.subr.bf16.mxu0 0
      %562 = vmatpush1.bf16.msra.mxu0 0
      %563 = vmatprep.subr.bf16.mxu0 0
      %564 = vmatpush1.bf16.msra.mxu0 %v547
      %565 = vmatprep.subr.bf16.mxu0 0
      %566 = vmatpush2.bf16.msra.mxu0 0
      %567 = vmatprep.subr.bf16.mxu0 0
      %568 = vmatpush2.bf16.msra.mxu0 0
      %569 = vmatprep.subr.bf16.mxu0 0
      %570 = vmatpush2.bf16.msra.mxu0 0
      %571 = vmatprep.subr.bf16.mxu0 0
      %572 = vmatpush2.bf16.msra.mxu0 0
      %573 = vmatprep.subr.bf16.mxu0 0
      %574 = vmatpush2.bf16.msra.mxu0 0
      %575 = vmatprep.subr.bf16.mxu0 0
      %576 = vmatpush2.bf16.msra.mxu0 0
      %577 = vmatprep.subr.bf16.mxu0 0
      %578 = vmatpush2.bf16.msra.mxu0 0
      %579 = vmatprep.subr.bf16.mxu0 0
      %580 = vmatpush2.bf16.msra.mxu0 0
      %581 = vmatprep.mubr.bf16.mxu0 0
      %582 = vmatmul.mubr.bf16.gmra.mxu0 %v544
      %v583 = vpop.f32.mrf.mxu0
      %v584 = vadd.f32 0.0, %v583
      %v585 = vpop.f32.mrf.mxu0
      %v586 = vpop.f32.mrf.mxu0
      %v587 = vadd.f32 0.0, %v586
      %v588 = vpop.f32.mrf.mxu0
      %589 = vdwg.mxu0
      %v591 = vsel %vm360, %v532, 0
      %v594 = vsel %vm364, %v540, 0
      %596 = vmatprep.subr.bf16.mxu0 0
      %597 = vmatpush1.bf16.msra.mxu0 0
      %598 = vmatprep.subr.bf16.mxu0 0
      %599 = vmatpush1.bf16.msra.mxu0 0
      %600 = vmatprep.subr.bf16.mxu0 0
      %601 = vmatpush1.bf16.msra.mxu0 0
      %602 = vmatprep.subr.bf16.mxu0 0
      %603 = vmatpush1.bf16.msra.mxu0 0
      %604 = vmatprep.subr.bf16.mxu0 0
      %605 = vmatpush1.bf16.msra.mxu0 0
      %606 = vmatprep.subr.bf16.mxu0 0
      %607 = vmatpush1.bf16.msra.mxu0 0
      %608 = vmatprep.subr.bf16.mxu0 0
      %609 = vmatpush1.bf16.msra.mxu0 0
      %610 = vmatprep.subr.bf16.mxu0 0
      %611 = vmatpush1.bf16.msra.mxu0 %v594
      %612 = vmatprep.subr.bf16.mxu0 0
      %613 = vmatpush2.bf16.msra.mxu0 0
      %614 = vmatprep.subr.bf16.mxu0 0
      %615 = vmatpush2.bf16.msra.mxu0 0
      %616 = vmatprep.subr.bf16.mxu0 0
      %617 = vmatpush2.bf16.msra.mxu0 0
      %618 = vmatprep.subr.bf16.mxu0 0
      %619 = vmatpush2.bf16.msra.mxu0 0
      %620 = vmatprep.subr.bf16.mxu0 0
      %621 = vmatpush2.bf16.msra.mxu0 0
      %622 = vmatprep.subr.bf16.mxu0 0
      %623 = vmatpush2.bf16.msra.mxu0 0
      %624 = vmatprep.subr.bf16.mxu0 0
      %625 = vmatpush2.bf16.msra.mxu0 0
      %626 = vmatprep.subr.bf16.mxu0 0
      %627 = vmatpush2.bf16.msra.mxu0 0
      %628 = vmatprep.mubr.bf16.mxu0 0
      %629 = vmatmul.mubr.bf16.gmra.mxu0 %v591
      %v630 = vpop.f32.mrf.mxu0
      %v631 = vadd.f32 %v584, %v630
      %v632 = vpop.f32.mrf.mxu0
      %v633 = vpop.f32.mrf.mxu0
      %v634 = vadd.f32 %v587, %v633
      %v635 = vpop.f32.mrf.mxu0
      %636 = vdwg.mxu0
      %s637 = scalar_lea.vmem %s2, 8
      %v638 = vld [vmem:[%s637] sm:$0xf]
      %v640 = vsel %vm360, %v539, 0
      %v643 = vsel %vm364, %v638, 0
      %645 = vmatprep.subr.bf16.mxu0 0
      %646 = vmatpush1.bf16.msra.mxu0 0
      %647 = vmatprep.subr.bf16.mxu0 0
      %648 = vmatpush1.bf16.msra.mxu0 0
      %649 = vmatprep.subr.bf16.mxu0 0
      %650 = vmatpush1.bf16.msra.mxu0 0
      %651 = vmatprep.subr.bf16.mxu0 0
      %652 = vmatpush1.bf16.msra.mxu0 0
      %653 = vmatprep.subr.bf16.mxu0 0
      %654 = vmatpush1.bf16.msra.mxu0 0
      %655 = vmatprep.subr.bf16.mxu0 0
      %656 = vmatpush1.bf16.msra.mxu0 0
      %657 = vmatprep.subr.bf16.mxu0 0
      %658 = vmatpush1.bf16.msra.mxu0 0
      %659 = vmatprep.subr.bf16.mxu0 0
      %660 = vmatpush1.bf16.msra.mxu0 %v643
      %661 = vmatprep.subr.bf16.mxu0 0
      %662 = vmatpush2.bf16.msra.mxu0 0
      %663 = vmatprep.subr.bf16.mxu0 0
      %664 = vmatpush2.bf16.msra.mxu0 0
      %665 = vmatprep.subr.bf16.mxu0 0
      %666 = vmatpush2.bf16.msra.mxu0 0
      %667 = vmatprep.subr.bf16.mxu0 0
      %668 = vmatpush2.bf16.msra.mxu0 0
      %669 = vmatprep.subr.bf16.mxu0 0
      %670 = vmatpush2.bf16.msra.mxu0 0
      %671 = vmatprep.subr.bf16.mxu0 0
      %672 = vmatpush2.bf16.msra.mxu0 0
      %673 = vmatprep.subr.bf16.mxu0 0
      %674 = vmatpush2.bf16.msra.mxu0 0
      %675 = vmatprep.subr.bf16.mxu0 0
      %676 = vmatpush2.bf16.msra.mxu0 0
      %677 = vmatprep.mubr.bf16.mxu0 0
      %678 = vmatmul.mubr.bf16.gmra.mxu0 %v640
      %v679 = vpop.f32.mrf.mxu0
      %v680 = vadd.f32 0.0, %v679
      %v681 = vpop.f32.mrf.mxu0
      %v682 = vpop.f32.mrf.mxu0
      %v683 = vadd.f32 0.0, %v682
      %v684 = vpop.f32.mrf.mxu0
      %685 = vdwg.mxu0
      %v686 = vadd.f32 %v631, %v680
      %v687 = vadd.f32 %v634, %v683
      %v688 = vld [vmem:[%s5] sm:$0x1]
      %v690 = vlaneseq
      %v691 = vshrl.u32 %v690, 7
      %v692 = vsub.s32 0, %v691
      %v693 = vrot.slane %v688, %v692
      %v695 = vmul.f32 %v686, %v693
      %v696 = vmul.f32 %v687, %v693
      %v697 = vld [vmem:[%s6] sm:$0x1]
      %v699 = vlaneseq
      %v700 = vshrl.u32 %v699, 7
      %v701 = vsub.s32 0, %v700
      %v702 = vrot.slane %v697, %v701
      %v704 = vadd.f32 %v695, %v702
      %v705 = vadd.f32 %v696, %v702
      %v706 = vadd.f32 %v285, %v704
      %v707 = vadd.f32 %v286, %v705
      %v708 = vmax.f32 %v706, 0.0
      %v709 = vmax.f32 %v707, 0.0
      %710 = vst.msk [vmem:[%s280] sm:$0xff] %vm360, %v708
      %711 = vst.msk [vmem:[%s280 + $0x8] sm:$0xff] %vm360, %v709
      %s712 = smul.u32 2, %s18
      %p713 = scmp.lt.s32.totalorder %s712, 3
      %s714 = scalar_select %p713, %s712, 3
      %s715 = smul.addr %s714, 8
      %s716 = scalar_lea.vmem %s7, %s715
      // Predicated region
      $region49: #{tpu_custom_call.1} parent=47 // pred_check
        %p717 = pneg %p188
      $region50: #{tpu_custom_call.1} parent=47 // pred_check_branch
        %719 = sbr.rel (%p717) target = $region52
      $region51: #{tpu_custom_call.1} parent=47 // pred_region
        %s720 = smul.u32 2, %s18
      $region52: #{tpu_custom_call.1} parent=47 // pred_fallthru
        _
    $region48: #{tpu_custom_call.1} parent=5 // pred_fallthru
      _
    %p721 = scmp.le.s32.totalorder 2, %s13
    // Predicated region
    $region53: #{tpu_custom_call.1} parent=5 // pred_check
      %p722 = pneg %p721
    $region54: #{tpu_custom_call.1} parent=5 // pred_check_branch
      %724 = sbr.rel (%p722) target = $region56
    $region55: #{tpu_custom_call.1} parent=5 // pred_region
      %s725 = ssub.s32 %s13, 2
      // Predicated region
      $region57: #{tpu_custom_call.1} parent=55 // pred_check
        %p726 = pneg %p194
      $region58: #{tpu_custom_call.1} parent=55 // pred_check_branch
        %728 = sbr.rel (%p726) target = $region60
      $region59: #{tpu_custom_call.1} parent=55 // pred_region
        %s729 = smul.u32 2, %s19
        %p730 = scmp.lt.s32.totalorder %s729, 3
        %s731 = scalar_select %p730, %s729, 3
        %s732 = smul.addr %s731, 8
        %s733 = scalar_lea.vmem %s7, %s732
      $region60: #{tpu_custom_call.1} parent=55 // pred_fallthru
        _
    $region56: #{tpu_custom_call.1} parent=5 // pred_fallthru
      _
  $region6: #{tpu_custom_call.1} parent=0 // loop_footer
    %s17 = sadd.s32 1, %s13
  $region7: #{tpu_custom_call.1} parent=0 // loop_footer_branch
    %12 = sbr.rel target = $region3
  $region8: #{tpu_custom_call.1} parent=0 // loop_exit
    _

// kernel: tpu_custom_call.1
$region0: #{tpu_custom_call.1}
  #allocation0 [shape = 'u32[]', space=smem, size = 0x4, offset = 0x4, fixed_abs, tag = 'smem constant byte address 0x4 - core index']
  #allocation1 [shape = 'u32[144,128]{1,0:T(1,128)}', space=vmem, size = 0x12000, scoped, tag = 'internal scratch']
  %s0 = inlined_call_operand.vmem [shape: f32[32,8], index: 0, kind: input, shape index: {}]
  %s1 = inlined_call_operand.vmem [shape: bf16[3,8,8], index: 1, kind: input, shape index: {}]
  %s2 = inlined_call_operand.vmem [shape: bf16[3,8,8], index: 2, kind: input, shape index: {}]
  %s3 = inlined_call_operand.vmem [shape: f32[1,8], index: 3, kind: input, shape index: {}]
  %s4 = inlined_call_operand.vmem [shape: f32[1,8], index: 4, kind: input, shape index: {}]
  %s5 = inlined_call_operand.vmem [shape: f32[1,8], index: 5, kind: input, shape index: {}]
  %s6 = inlined_call_operand.vmem [shape: f32[1,8], index: 6, kind: input, shape index: {}]
  %s7 = inlined_call_operand.vmem [shape: f32[32,8], index: 7, kind: output, shape index: {}]
  %s8 = sld [smem:[#allocation0]]
  $region61: #{tpu_custom_call.1} parent=0
    _
  %s10 = ssub.s32 1, %s8
  %s11 = scalar_select 0, %s10, %s8
  loop: start=0, step=1, limit=4
  $region2: #{tpu_custom_call.1} parent=0 // loop_pre_header
    _
  $region3: #{tpu_custom_call.1} parent=0 // loop_header
    %s13 = sphi 0, %s17
    %p14 = scmp.ge.s32.totalorder %s13, 4
    %s23 = sphi 0, %s25
    %s26 = sphi 0, %s23
    %s27 = sphi 0, %s26
    %s43 = sphi 0, %s27
    %s47 = sphi 0, %s47
    %s49 = sphi 0, %s47
    %s50 = sphi 0, %s49
    %s64 = sphi 0, %s50
    %s68 = sphi 0, %s68
    %s70 = sphi 0, %s68
    %s71 = sphi 0, %s70
    %s85 = sphi 0, %s71
    %s89 = sphi 0, %s89
    %s91 = sphi 0, %s89
    %s92 = sphi 0, %s91
    %s106 = sphi 0, %s92
    %s110 = sphi 0, %s110
    %s112 = sphi 0, %s110
    %s113 = sphi 0, %s112
    %s127 = sphi 0, %s113
    %s131 = sphi 0, %s131
    %s133 = sphi 0, %s131
    %s134 = sphi 0, %s133
    %s148 = sphi 0, %s134
    %s152 = sphi 0, %s152
    %s154 = sphi 0, %s152
    %s155 = sphi 0, %s154
    %s169 = sphi 0, %s155
    %s175 = sphi 0, %s177
    %s178 = sphi 0, %s175
    %s179 = sphi 0, %s178
    %s195 = sphi 0, %s179
  $region4: #{tpu_custom_call.1} parent=0 // loop_header_branch
    %16 = sbr.rel (%p14) target = $region8
  $region5: #{tpu_custom_call.1} parent=0 // loop_body
    %s18 = ssub.s32 %s13, 1
    %s19 = ssub.s32 %s13, 2
    %s20 = sadd.s32 %s13, 1
    %s21 = ssub.s32 %s13, %s20
    %p22 = scmp.eq.s32.totalorder %s21, 0
    %s24 = sadd.s32 %s23, 1
    %s25 = scalar_select %p22, %s23, %s24
    %p28 = pneg %p22
    %p29 = scmp.eq.s32.totalorder %s13, 1
    %p30 = por %p28, %p29
    %p31 = scmp.ne.s32.totalorder %s23, %s26
    %p32 = scmp.eq.s32.totalorder %s13, 0
    %p33 = por %p31, %p32
    %p34 = scmp.ne.s32.totalorder %s23, %s26
    %p35 = scmp.eq.s32.totalorder %s18, 1
    %p36 = por %p34, %p35
    %p37 = scmp.ne.s32.totalorder %s26, %s27
    %p38 = scmp.eq.s32.totalorder %s18, 0
    %p39 = por %p37, %p38
    %p40 = scmp.ne.s32.totalorder %s26, %s27
    %p41 = scmp.eq.s32.totalorder %s19, 1
    %p42 = por %p40, %p41
    %p44 = scmp.ne.s32.totalorder %s27, %s43
    %p45 = scmp.eq.s32.totalorder %s19, 0
    %p46 = por %p44, %p45
    %s48 = sadd.s32 %s47, 1
    %p51 = scmp.eq.s32.totalorder %s13, 1
    %p52 = scmp.ne.s32.totalorder %s47, %s49
    %p53 = scmp.eq.s32.totalorder %s13, 0
    %p54 = por %p52, %p53
    %p55 = scmp.ne.s32.totalorder %s47, %s49
    %p56 = scmp.eq.s32.totalorder %s18, 1
    %p57 = por %p55, %p56
    %p58 = scmp.ne.s32.totalorder %s49, %s50
    %p59 = scmp.eq.s32.totalorder %s18, 0
    %p60 = por %p58, %p59
    %p61 = scmp.ne.s32.totalorder %s49, %s50
    %p62 = scmp.eq.s32.totalorder %s19, 1
    %p63 = por %p61, %p62
    %p65 = scmp.ne.s32.totalorder %s50, %s64
    %p66 = scmp.eq.s32.totalorder %s19, 0
    %p67 = por %p65, %p66
    %s69 = sadd.s32 %s68, 1
    %p72 = scmp.eq.s32.totalorder %s13, 1
    %p73 = scmp.ne.s32.totalorder %s68, %s70
    %p74 = scmp.eq.s32.totalorder %s13, 0
    %p75 = por %p73, %p74
    %p76 = scmp.ne.s32.totalorder %s68, %s70
    %p77 = scmp.eq.s32.totalorder %s18, 1
    %p78 = por %p76, %p77
    %p79 = scmp.ne.s32.totalorder %s70, %s71
    %p80 = scmp.eq.s32.totalorder %s18, 0
    %p81 = por %p79, %p80
    %p82 = scmp.ne.s32.totalorder %s70, %s71
    %p83 = scmp.eq.s32.totalorder %s19, 1
    %p84 = por %p82, %p83
    %p86 = scmp.ne.s32.totalorder %s71, %s85
    %p87 = scmp.eq.s32.totalorder %s19, 0
    %p88 = por %p86, %p87
    %s90 = sadd.s32 %s89, 1
    %p93 = scmp.eq.s32.totalorder %s13, 1
    %p94 = scmp.ne.s32.totalorder %s89, %s91
    %p95 = scmp.eq.s32.totalorder %s13, 0
    %p96 = por %p94, %p95
    %p97 = scmp.ne.s32.totalorder %s89, %s91
    %p98 = scmp.eq.s32.totalorder %s18, 1
    %p99 = por %p97, %p98
    %p100 = scmp.ne.s32.totalorder %s91, %s92
    %p101 = scmp.eq.s32.totalorder %s18, 0
    %p102 = por %p100, %p101
    %p103 = scmp.ne.s32.totalorder %s91, %s92
    %p104 = scmp.eq.s32.totalorder %s19, 1
    %p105 = por %p103, %p104
    %p107 = scmp.ne.s32.totalorder %s92, %s106
    %p108 = scmp.eq.s32.totalorder %s19, 0
    %p109 = por %p107, %p108
    %s111 = sadd.s32 %s110, 1
    %p114 = scmp.eq.s32.totalorder %s13, 1
    %p115 = scmp.ne.s32.totalorder %s110, %s112
    %p116 = scmp.eq.s32.totalorder %s13, 0
    %p117 = por %p115, %p116
    %p118 = scmp.ne.s32.totalorder %s110, %s112
    %p119 = scmp.eq.s32.totalorder %s18, 1
    %p120 = por %p118, %p119
    %p121 = scmp.ne.s32.totalorder %s112, %s113
    %p122 = scmp.eq.s32.totalorder %s18, 0
    %p123 = por %p121, %p122
    %p124 = scmp.ne.s32.totalorder %s112, %s113
    %p125 = scmp.eq.s32.totalorder %s19, 1
    %p126 = por %p124, %p125
    %p128 = scmp.ne.s32.totalorder %s113, %s127
    %p129 = scmp.eq.s32.totalorder %s19, 0
    %p130 = por %p128, %p129
    %s132 = sadd.s32 %s131, 1
    %p135 = scmp.eq.s32.totalorder %s13, 1
    %p136 = scmp.ne.s32.totalorder %s131, %s133
    %p137 = scmp.eq.s32.totalorder %s13, 0
    %p138 = por %p136, %p137
    %p139 = scmp.ne.s32.totalorder %s131, %s133
    %p140 = scmp.eq.s32.totalorder %s18, 1
    %p141 = por %p139, %p140
    %p142 = scmp.ne.s32.totalorder %s133, %s134
    %p143 = scmp.eq.s32.totalorder %s18, 0
    %p144 = por %p142, %p143
    %p145 = scmp.ne.s32.totalorder %s133, %s134
    %p146 = scmp.eq.s32.totalorder %s19, 1
    %p147 = por %p145, %p146
    %p149 = scmp.ne.s32.totalorder %s134, %s148
    %p150 = scmp.eq.s32.totalorder %s19, 0
    %p151 = por %p149, %p150
    %s153 = sadd.s32 %s152, 1
    %p156 = scmp.eq.s32.totalorder %s13, 1
    %p157 = scmp.ne.s32.totalorder %s152, %s154
    %p158 = scmp.eq.s32.totalorder %s13, 0
    %p159 = por %p157, %p158
    %p160 = scmp.ne.s32.totalorder %s152, %s154
    %p161 = scmp.eq.s32.totalorder %s18, 1
    %p162 = por %p160, %p161
    %p163 = scmp.ne.s32.totalorder %s154, %s155
    %p164 = scmp.eq.s32.totalorder %s18, 0
    %p165 = por %p163, %p164
    %p166 = scmp.ne.s32.totalorder %s154, %s155
    %p167 = scmp.eq.s32.totalorder %s19, 1
    %p168 = por %p166, %p167
    %p170 = scmp.ne.s32.totalorder %s155, %s169
    %p171 = scmp.eq.s32.totalorder %s19, 0
    %p172 = por %p170, %p171
    %s173 = ssub.s32 %s13, %s20
    %p174 = scmp.eq.s32.totalorder %s173, 0
    %s176 = sadd.s32 %s175, 1
    %s177 = scalar_select %p174, %s175, %s176
    %p180 = pneg %p174
    %p181 = scmp.eq.s32.totalorder %s13, 1
    %p182 = por %p180, %p181
    %p183 = scmp.ne.s32.totalorder %s175, %s178
    %p184 = scmp.eq.s32.totalorder %s13, 0
    %p185 = por %p183, %p184
    %p186 = scmp.ne.s32.totalorder %s175, %s178
    %p187 = scmp.eq.s32.totalorder %s18, 1
    %p188 = por %p186, %p187
    %p189 = scmp.ne.s32.totalorder %s178, %s179
    %p190 = scmp.eq.s32.totalorder %s18, 0
    %p191 = por %p189, %p190
    %p192 = scmp.ne.s32.totalorder %s178, %s179
    %p193 = scmp.eq.s32.totalorder %s19, 1
    %p194 = por %p192, %p193
    %p196 = scmp.ne.s32.totalorder %s179, %s195
    %p197 = scmp.eq.s32.totalorder %s19, 0
    %p198 = por %p196, %p197
    %p199 = scmp.le.s32.totalorder 1, %s13
    %p200 = scmp.lt.s32.totalorder %s13, 3
    %p201 = pnand %p199, %p200
    %p202 = pneg %p201
    // Predicated region
    $region9: #{tpu_custom_call.1} parent=5 // pred_check
      _
    $region10: #{tpu_custom_call.1} parent=5 // pred_check_branch
      %204 = sbr.rel (%p201) target = $region12
    $region11: #{tpu_custom_call.1} parent=5 // pred_region
      %s205 = ssub.s32 %s13, 1
      // Predicated region
      $region13: #{tpu_custom_call.1} parent=11 // pred_check
        %p206 = pneg %p60
      $region14: #{tpu_custom_call.1} parent=11 // pred_check_branch
        %208 = sbr.rel (%p206) target = $region16
      $region15: #{tpu_custom_call.1} parent=11 // pred_region
        _
      $region16: #{tpu_custom_call.1} parent=11 // pred_fallthru
        _
      // Predicated region
      $region17: #{tpu_custom_call.1} parent=11 // pred_check
        %p209 = pneg %p81
      $region18: #{tpu_custom_call.1} parent=11 // pred_check_branch
        %211 = sbr.rel (%p209) target = $region20
      $region19: #{tpu_custom_call.1} parent=11 // pred_region
        _
      $region20: #{tpu_custom_call.1} parent=11 // pred_fallthru
        _
      // Predicated region
      $region21: #{tpu_custom_call.1} parent=11 // pred_check
        %p212 = pneg %p102
      $region22: #{tpu_custom_call.1} parent=11 // pred_check_branch
        %214 = sbr.rel (%p212) target = $region24
      $region23: #{tpu_custom_call.1} parent=11 // pred_region
        _
      $region24: #{tpu_custom_call.1} parent=11 // pred_fallthru
        _
      // Predicated region
      $region25: #{tpu_custom_call.1} parent=11 // pred_check
        %p215 = pneg %p123
      $region26: #{tpu_custom_call.1} parent=11 // pred_check_branch
        %217 = sbr.rel (%p215) target = $region28
      $region27: #{tpu_custom_call.1} parent=11 // pred_region
        _
      $region28: #{tpu_custom_call.1} parent=11 // pred_fallthru
        _
      // Predicated region
      $region29: #{tpu_custom_call.1} parent=11 // pred_check
        %p218 = pneg %p144
      $region30: #{tpu_custom_call.1} parent=11 // pred_check_branch
        %220 = sbr.rel (%p218) target = $region32
      $region31: #{tpu_custom_call.1} parent=11 // pred_region
        _
      $region32: #{tpu_custom_call.1} parent=11 // pred_fallthru
        _
      // Predicated region
      $region33: #{tpu_custom_call.1} parent=11 // pred_check
        %p221 = pneg %p165
      $region34: #{tpu_custom_call.1} parent=11 // pred_check_branch
        %223 = sbr.rel (%p221) target = $region36
      $region35: #{tpu_custom_call.1} parent=11 // pred_region
        _
      $region36: #{tpu_custom_call.1} parent=11 // pred_fallthru
        _
    $region12: #{tpu_custom_call.1} parent=5 // pred_fallthru
      _
    %p224 = scmp.lt.s32.totalorder %s13, 2
    // Predicated region
    $region37: #{tpu_custom_call.1} parent=5 // pred_check
      %p225 = pneg %p224
    $region38: #{tpu_custom_call.1} parent=5 // pred_check_branch
      %227 = sbr.rel (%p225) target = $region40
    $region39: #{tpu_custom_call.1} parent=5 // pred_region
      // Predicated region
      $region41: #{tpu_custom_call.1} parent=39 // pred_check
        %p228 = pneg %p33
      $region42: #{tpu_custom_call.1} parent=39 // pred_check_branch
        %230 = sbr.rel (%p228) target = $region44
      $region43: #{tpu_custom_call.1} parent=39 // pred_region
        %s231 = smul.u32 2, %s13
        %p232 = scmp.lt.s32.totalorder %s231, 3
        %s233 = scalar_select %p232, %s231, 3
        %s234 = smul.addr %s233, 8
        %s235 = scalar_lea.vmem %s0, %s234
        %s236 = smul.u32 2, %s13
      $region44: #{tpu_custom_call.1} parent=39 // pred_fallthru
        _
    $region40: #{tpu_custom_call.1} parent=5 // pred_fallthru
      _
    %p237 = scmp.le.s32.totalorder 1, %s13
    %p238 = scmp.lt.s32.totalorder %s13, 3
    %p239 = pnand %p237, %p238
    %p240 = pneg %p239
    // Predicated region
    $region45: #{tpu_custom_call.1} parent=5 // pred_check
      _
    $region46: #{tpu_custom_call.1} parent=5 // pred_check_branch
      %242 = sbr.rel (%p239) target = $region48
    $region47: #{tpu_custom_call.1} parent=5 // pred_region
      %s243 = ssub.s32 %s13, 1
      %s244 = smul.u32 2, %s18
      %p245 = scmp.lt.s32.totalorder %s244, 3
      %s246 = scalar_select %p245, %s244, 3
      %s247 = smul.addr %s246, 8
      %s248 = scalar_lea.vmem %s0, %s247
      %p249 = pneg %p39
      %p250 = pneg %p36
      %p251 = pneg %p60
      %p252 = pneg %p57
      %p253 = pneg %p81
      %p254 = pneg %p78
      %p255 = pneg %p102
      %p256 = pneg %p99
      %p257 = pneg %p123
      %p258 = pneg %p120
      %p259 = pneg %p144
      %p260 = pneg %p141
      %p261 = pneg %p165
      %p262 = pneg %p162
      %p263 = pneg %p191
      %p264 = pneg %p188
      %s265 = smul.u32 2, %s18
      %p266 = scmp.lt.s32.totalorder %s265, 3
      %s267 = scalar_select %p266, %s265, 3
      %s268 = smul.addr %s267, 8
      %s269 = scalar_lea.vmem %s7, %s268
      %s270 = smul.u32 2, %s18
      %p271 = scmp.lt.s32.totalorder %s270, 3
      %s272 = scalar_select %p271, %s270, 3
      %s273 = smul.addr %s272, 8
      %s274 = scalar_lea.vmem %s0, %s273
      %s275 = smul.u32 2, %s18
      %s276 = smul.u32 2, %s18
      %p277 = scmp.lt.s32.totalorder %s276, 3
      %s278 = scalar_select %p277, %s276, 3
      %s279 = smul.addr %s278, 8
      %s280 = scalar_lea.vmem %s7, %s279
      %s281 = smul.u32 2, %s18
      %v285 = vld [vmem:[%s274] sm:$0xff]
      %v286 = vld [vmem:[%s274 + $0x8] sm:$0xff]
      %v287 = vlaneseq
      %v288 = vshrl.u32 %v287, 7
      %v289 = vadd.s32 %v288, 8
      %vm290 = vcmp.lt.s32.totalorder %v288, 0
      %v291 = vsub.s32 0, %v288
      %v292 = vsel %vm290, %v291, %v288
      %v293 = vshrl.u32 %v292, 4
      %v294 = vand.u32 %v292, 15
      %v295 = vsub.s32 0, %v294
      %v296 = vsel %vm290, %v295, %v294
      %vm297 = vcmp.lt.s32.totalorder %v289, 0
      %v298 = vsub.s32 0, %v289
      %v299 = vsel %vm297, %v298, %v289
      %v300 = vshrl.u32 %v299, 4
      %v301 = vand.u32 %v299, 15
      %v302 = vsub.s32 0, %v301
      %v303 = vsel %vm297, %v302, %v301
      %vm304 = vcmp.ne.s32.totalorder %v296, 0
      %vm305 = vcmp.ne.s32.totalorder %v303, 0
      %vm306 = vcmp.lt.s32.totalorder %v296, 0
      %vm307 = vcmp.lt.s32.totalorder %v303, 0
      %vm308 = vmand %vm306, %vm304
      %vm309 = vmand %vm307, %vm305
      %v310 = vadd.s32 %v296, 16
      %v311 = vadd.s32 %v303, 16
      %v312 = vsel %vm308, %v310, %v296
      %v313 = vsel %vm309, %v311, %v303
      %vm314 = vcmp.ge.s32.totalorder %v312, 1
      %vm315 = vcmp.ge.s32.totalorder %v313, 1
      %vm316 = vcmp.lt.s32.totalorder %v312, 17
      %vm317 = vcmp.lt.s32.totalorder %v313, 17
      %vm318 = vmand %vm314, %vm316
      %vm319 = vmand %vm315, %vm317
      %vm320 = vcmp.ge.s32.totalorder %v312, 4294967295
      %vm321 = vcmp.ge.s32.totalorder %v313, 4294967295
      %vm322 = vcmp.lt.s32.totalorder %v312, 15
      %vm323 = vcmp.lt.s32.totalorder %v313, 15
      %vm324 = vmand %vm320, %vm322
      %vm325 = vmand %vm321, %vm323
      %v326 = vrot.slane %v285, 7
      %v327 = vrot.slane %v286, 7
      %vm328 = vcmp.lt.s32.totalorder %v288, 1
      %v329 = vsel %vm328, %v326, %v327
      %v330 = vsel %vm328, %v327, %v326
      %v331 = vpack.c.bf16 %v329, %v330
      %vm332 = vmpackc.low %vm318, %vm318
      %vm333 = vmpackc.low %vm319, %vm319
      %v334 = vsel %vm332, 65537, 0
      %v335 = vsel %vm333, 65537, 0
      %v336 = vunpack.c.l.b16 %v334
      %v337 = vunpack.c.l.b16 %v335
      %v338 = vpack.c.b16 %v337, %v336
      %vm339 = vcmp.ne.s16.totalorder %v338, 0
      %v340 = vsel %vm339, %v331, 0
      %v341 = vpack.c.bf16 %v286, %v285
      %v342 = vrot.slane %v285, 1
      %v343 = vrot.slane %v286, 1
      %vm344 = vcmp.lt.s32.totalorder %v288, 7
      %v345 = vsel %vm344, %v342, %v343
      %v346 = vsel %vm344, %v343, %v342
      %v347 = vpack.c.bf16 %v346, %v345
      %vm348 = vmpackc.low %vm324, %vm324
      %vm349 = vmpackc.low %vm325, %vm325
      %v350 = vsel %vm348, 65537, 0
      %v351 = vsel %vm349, 65537, 0
      %v352 = vunpack.c.l.b16 %v350
      %v353 = vunpack.c.l.b16 %v351
      %v354 = vpack.c.b16 %v353, %v352
      %vm355 = vcmp.ne.s16.totalorder %v354, 0
      %v356 = vsel %vm355, %v347, 0
      %v357 = vld [vmem:[%s1] sm:$0xf]
      %s358 = scalar_lea.vmem %s1, 4
      %v359 = vld [vmem:[%s358] sm:$0xf]
      %vm360 = vcmask 64512
      %v362 = vsel %vm360, %v341, 0
      %vm364 = vcmask 1043456
      %v366 = vsel %vm364, %v359, 0
      %368 = vmatprep.subr.bf16.mxu0 0
      %369 = vmatpush1.bf16.msra.mxu0 0
      %370 = vmatprep.subr.bf16.mxu0 0
      %371 = vmatpush1.bf16.msra.mxu0 0
      %372 = vmatprep.subr.bf16.mxu0 0
      %373 = vmatpush1.bf16.msra.mxu0 0
      %374 = vmatprep.subr.bf16.mxu0 0
      %375 = vmatpush1.bf16.msra.mxu0 0
      %376 = vmatprep.subr.bf16.mxu0 0
      %377 = vmatpush1.bf16.msra.mxu0 0
      %378 = vmatprep.subr.bf16.mxu0 0
      %379 = vmatpush1.bf16.msra.mxu0 0
      %380 = vmatprep.subr.bf16.mxu0 0
      %381 = vmatpush1.bf16.msra.mxu0 0
      %382 = vmatprep.subr.bf16.mxu0 0
      %383 = vmatpush1.bf16.msra.mxu0 %v366
      %384 = vmatprep.subr.bf16.mxu0 0
      %385 = vmatpush2.bf16.msra.mxu0 0
      %386 = vmatprep.subr.bf16.mxu0 0
      %387 = vmatpush2.bf16.msra.mxu0 0
      %388 = vmatprep.subr.bf16.mxu0 0
      %389 = vmatpush2.bf16.msra.mxu0 0
      %390 = vmatprep.subr.bf16.mxu0 0
      %391 = vmatpush2.bf16.msra.mxu0 0
      %392 = vmatprep.subr.bf16.mxu0 0
      %393 = vmatpush2.bf16.msra.mxu0 0
      %394 = vmatprep.subr.bf16.mxu0 0
      %395 = vmatpush2.bf16.msra.mxu0 0
      %396 = vmatprep.subr.bf16.mxu0 0
      %397 = vmatpush2.bf16.msra.mxu0 0
      %398 = vmatprep.subr.bf16.mxu0 0
      %399 = vmatpush2.bf16.msra.mxu0 0
      %400 = vmatprep.mubr.bf16.mxu0 0
      %401 = vmatmul.mubr.bf16.gmra.mxu0 %v362
      %v402 = vpop.f32.mrf.mxu0
      %v403 = vadd.f32 0.0, %v402
      %v404 = vpop.f32.mrf.mxu0
      %v405 = vpop.f32.mrf.mxu0
      %v406 = vadd.f32 0.0, %v405
      %v407 = vpop.f32.mrf.mxu0
      %408 = vdwg.mxu0
      %v410 = vsel %vm360, %v340, 0
      %v413 = vsel %vm364, %v357, 0
      %415 = vmatprep.subr.bf16.mxu0 0
      %416 = vmatpush1.bf16.msra.mxu0 0
      %417 = vmatprep.subr.bf16.mxu0 0
      %418 = vmatpush1.bf16.msra.mxu0 0
      %419 = vmatprep.subr.bf16.mxu0 0
      %420 = vmatpush1.bf16.msra.mxu0 0
      %421 = vmatprep.subr.bf16.mxu0 0
      %422 = vmatpush1.bf16.msra.mxu0 0
      %423 = vmatprep.subr.bf16.mxu0 0
      %424 = vmatpush1.bf16.msra.mxu0 0
      %425 = vmatprep.subr.bf16.mxu0 0
      %426 = vmatpush1.bf16.msra.mxu0 0
      %427 = vmatprep.subr.bf16.mxu0 0
      %428 = vmatpush1.bf16.msra.mxu0 0
      %429 = vmatprep.subr.bf16.mxu0 0
      %430 = vmatpush1.bf16.msra.mxu0 %v413
      %431 = vmatprep.subr.bf16.mxu0 0
      %432 = vmatpush2.bf16.msra.mxu0 0
      %433 = vmatprep.subr.bf16.mxu0 0
      %434 = vmatpush2.bf16.msra.mxu0 0
      %435 = vmatprep.subr.bf16.mxu0 0
      %436 = vmatpush2.bf16.msra.mxu0 0
      %437 = vmatprep.subr.bf16.mxu0 0
      %438 = vmatpush2.bf16.msra.mxu0 0
      %439 = vmatprep.subr.bf16.mxu0 0
      %440 = vmatpush2.bf16.msra.mxu0 0
      %441 = vmatprep.subr.bf16.mxu0 0
      %442 = vmatpush2.bf16.msra.mxu0 0
      %443 = vmatprep.subr.bf16.mxu0 0
      %444 = vmatpush2.bf16.msra.mxu0 0
      %445 = vmatprep.subr.bf16.mxu0 0
      %446 = vmatpush2.bf16.msra.mxu0 0
      %447 = vmatprep.mubr.bf16.mxu0 0
      %448 = vmatmul.mubr.bf16.gmra.mxu0 %v410
      %v449 = vpop.f32.mrf.mxu0
      %v450 = vadd.f32 %v403, %v449
      %v451 = vpop.f32.mrf.mxu0
      %v452 = vpop.f32.mrf.mxu0
      %v453 = vadd.f32 %v406, %v452
      %v454 = vpop.f32.mrf.mxu0
      %455 = vdwg.mxu0
      %s456 = scalar_lea.vmem %s1, 8
      %v457 = vld [vmem:[%s456] sm:$0xf]
      %v459 = vsel %vm360, %v356, 0
      %v462 = vsel %vm364, %v457, 0
      %464 = vmatprep.subr.bf16.mxu0 0
      %465 = vmatpush1.bf16.msra.mxu0 0
      %466 = vmatprep.subr.bf16.mxu0 0
      %467 = vmatpush1.bf16.msra.mxu0 0
      %468 = vmatprep.subr.bf16.mxu0 0
      %469 = vmatpush1.bf16.msra.mxu0 0
      %470 = vmatprep.subr.bf16.mxu0 0
      %471 = vmatpush1.bf16.msra.mxu0 0
      %472 = vmatprep.subr.bf16.mxu0 0
      %473 = vmatpush1.bf16.msra.mxu0 0
      %474 = vmatprep.subr.bf16.mxu0 0
      %475 = vmatpush1.bf16.msra.mxu0 0
      %476 = vmatprep.subr.bf16.mxu0 0
      %477 = vmatpush1.bf16.msra.mxu0 0
      %478 = vmatprep.subr.bf16.mxu0 0
      %479 = vmatpush1.bf16.msra.mxu0 %v462
      %480 = vmatprep.subr.bf16.mxu0 0
      %481 = vmatpush2.bf16.msra.mxu0 0
      %482 = vmatprep.subr.bf16.mxu0 0
      %483 = vmatpush2.bf16.msra.mxu0 0
      %484 = vmatprep.subr.bf16.mxu0 0
      %485 = vmatpush2.bf16.msra.mxu0 0
      %486 = vmatprep.subr.bf16.mxu0 0
      %487 = vmatpush2.bf16.msra.mxu0 0
      %488 = vmatprep.subr.bf16.mxu0 0
      %489 = vmatpush2.bf16.msra.mxu0 0
      %490 = vmatprep.subr.bf16.mxu0 0
      %491 = vmatpush2.bf16.msra.mxu0 0
      %492 = vmatprep.subr.bf16.mxu0 0
      %493 = vmatpush2.bf16.msra.mxu0 0
      %494 = vmatprep.subr.bf16.mxu0 0
      %495 = vmatpush2.bf16.msra.mxu0 0
      %496 = vmatprep.mubr.bf16.mxu0 0
      %497 = vmatmul.mubr.bf16.gmra.mxu0 %v459
      %v498 = vpop.f32.mrf.mxu0
      %v499 = vadd.f32 0.0, %v498
      %v500 = vpop.f32.mrf.mxu0
      %v501 = vpop.f32.mrf.mxu0
      %v502 = vadd.f32 0.0, %v501
      %v503 = vpop.f32.mrf.mxu0
      %504 = vdwg.mxu0
      %v505 = vadd.f32 %v450, %v499
      %v506 = vadd.f32 %v453, %v502
      %v507 = vld [vmem:[%s3] sm:$0x1]
      %v509 = vlaneseq
      %v510 = vshrl.u32 %v509, 7
      %v511 = vsub.s32 0, %v510
      %v512 = vrot.slane %v507, %v511
      %v514 = vmul.f32 %v505, %v512
      %v515 = vmul.f32 %v506, %v512
      %v516 = vld [vmem:[%s4] sm:$0x1]
      %v518 = vlaneseq
      %v519 = vshrl.u32 %v518, 7
      %v520 = vsub.s32 0, %v519
      %v521 = vrot.slane %v516, %v520
      %v523 = vadd.f32 %v514, %v521
      %v524 = vadd.f32 %v515, %v521
      %v525 = vmax.f32 %v523, 0.0
      %v526 = vmax.f32 %v524, 0.0
      %v527 = vrot.slane %v525, 7
      %v528 = vrot.slane %v526, 7
      %v529 = vsel %vm328, %v527, %v528
      %v530 = vsel %vm328, %v528, %v527
      %v531 = vpack.c.bf16 %v529, %v530
      %v532 = vsel %vm339, %v531, 0
      %v533 = vpack.c.bf16 %v526, %v525
      %v534 = vrot.slane %v525, 1
      %v535 = vrot.slane %v526, 1
      %v536 = vsel %vm344, %v534, %v535
      %v537 = vsel %vm344, %v535, %v534
      %v538 = vpack.c.bf16 %v537, %v536
      %v539 = vsel %vm355, %v538, 0
      %v540 = vld [vmem:[%s2] sm:$0xf]
      %s541 = scalar_lea.vmem %s2, 4
      %v542 = vld [vmem:[%s541] sm:$0xf]
      %v544 = vsel %vm360, %v533, 0
      %v547 = vsel %vm364, %v542, 0
      %549 = vmatprep.subr.bf16.mxu0 0
      %550 = vmatpush1.bf16.msra.mxu0 0
      %551 = vmatprep.subr.bf16.mxu0 0
      %552 = vmatpush1.bf16.msra.mxu0 0
      %553 = vmatprep.subr.bf16.mxu0 0
      %554 = vmatpush1.bf16.msra.mxu0 0
      %555 = vmatprep.subr.bf16.mxu0 0
      %556 = vmatpush1.bf16.msra.mxu0 0
      %557 = vmatprep.subr.bf16.mxu0 0
      %558 = vmatpush1.bf16.msra.mxu0 0
      %559 = vmatprep.subr.bf16.mxu0 0
      %560 = vmatpush1.bf16.msra.mxu0 0
      %561 = vmatprep.subr.bf16.mxu0 0
      %562 = vmatpush1.bf16.msra.mxu0 0
      %563 = vmatprep.subr.bf16.mxu0 0
      %564 = vmatpush1.bf16.msra.mxu0 %v547
      %565 = vmatprep.subr.bf16.mxu0 0
      %566 = vmatpush2.bf16.msra.mxu0 0
      %567 = vmatprep.subr.bf16.mxu0 0
      %568 = vmatpush2.bf16.msra.mxu0 0
      %569 = vmatprep.subr.bf16.mxu0 0
      %570 = vmatpush2.bf16.msra.mxu0 0
      %571 = vmatprep.subr.bf16.mxu0 0
      %572 = vmatpush2.bf16.msra.mxu0 0
      %573 = vmatprep.subr.bf16.mxu0 0
      %574 = vmatpush2.bf16.msra.mxu0 0
      %575 = vmatprep.subr.bf16.mxu0 0
      %576 = vmatpush2.bf16.msra.mxu0 0
      %577 = vmatprep.subr.bf16.mxu0 0
      %578 = vmatpush2.bf16.msra.mxu0 0
      %579 = vmatprep.subr.bf16.mxu0 0
      %580 = vmatpush2.bf16.msra.mxu0 0
      %581 = vmatprep.mubr.bf16.mxu0 0
      %582 = vmatmul.mubr.bf16.gmra.mxu0 %v544
      %v583 = vpop.f32.mrf.mxu0
      %v584 = vadd.f32 0.0, %v583
      %v585 = vpop.f32.mrf.mxu0
      %v586 = vpop.f32.mrf.mxu0
      %v587 = vadd.f32 0.0, %v586
      %v588 = vpop.f32.mrf.mxu0
      %589 = vdwg.mxu0
      %v591 = vsel %vm360, %v532, 0
      %v594 = vsel %vm364, %v540, 0
      %596 = vmatprep.subr.bf16.mxu0 0
      %597 = vmatpush1.bf16.msra.mxu0 0
      %598 = vmatprep.subr.bf16.mxu0 0
      %599 = vmatpush1.bf16.msra.mxu0 0
      %600 = vmatprep.subr.bf16.mxu0 0
      %601 = vmatpush1.bf16.msra.mxu0 0
      %602 = vmatprep.subr.bf16.mxu0 0
      %603 = vmatpush1.bf16.msra.mxu0 0
      %604 = vmatprep.subr.bf16.mxu0 0
      %605 = vmatpush1.bf16.msra.mxu0 0
      %606 = vmatprep.subr.bf16.mxu0 0
      %607 = vmatpush1.bf16.msra.mxu0 0
      %608 = vmatprep.subr.bf16.mxu0 0
      %609 = vmatpush1.bf16.msra.mxu0 0
      %610 = vmatprep.subr.bf16.mxu0 0
      %611 = vmatpush1.bf16.msra.mxu0 %v594
      %612 = vmatprep.subr.bf16.mxu0 0
      %613 = vmatpush2.bf16.msra.mxu0 0
      %614 = vmatprep.subr.bf16.mxu0 0
      %615 = vmatpush2.bf16.msra.mxu0 0
      %616 = vmatprep.subr.bf16.mxu0 0
      %617 = vmatpush2.bf16.msra.mxu0 0
      %618 = vmatprep.subr.bf16.mxu0 0
      %619 = vmatpush2.bf16.msra.mxu0 0
      %620 = vmatprep.subr.bf16.mxu0 0
      %621 = vmatpush2.bf16.msra.mxu0 0
      %622 = vmatprep.subr.bf16.mxu0 0
      %623 = vmatpush2.bf16.msra.mxu0 0
      %624 = vmatprep.subr.bf16.mxu0 0
      %625 = vmatpush2.bf16.msra.mxu0 0
      %626 = vmatprep.subr.bf16.mxu0 0
      %627 = vmatpush2.bf16.msra.mxu0 0
      %628 = vmatprep.mubr.bf16.mxu0 0
      %629 = vmatmul.mubr.bf16.gmra.mxu0 %v591
      %v630 = vpop.f32.mrf.mxu0
      %v631 = vadd.f32 %v584, %v630
      %v632 = vpop.f32.mrf.mxu0
      %v633 = vpop.f32.mrf.mxu0
      %v634 = vadd.f32 %v587, %v633
      %v635 = vpop.f32.mrf.mxu0
      %636 = vdwg.mxu0
      %s637 = scalar_lea.vmem %s2, 8
      %v638 = vld [vmem:[%s637] sm:$0xf]
      %v640 = vsel %vm360, %v539, 0
      %v643 = vsel %vm364, %v638, 0
      %645 = vmatprep.subr.bf16.mxu0 0
      %646 = vmatpush1.bf16.msra.mxu0 0
      %647 = vmatprep.subr.bf16.mxu0 0
      %648 = vmatpush1.bf16.msra.mxu0 0
      %649 = vmatprep.subr.bf16.mxu0 0
      %650 = vmatpush1.bf16.msra.mxu0 0
      %651 = vmatprep.subr.bf16.mxu0 0
      %652 = vmatpush1.bf16.msra.mxu0 0
      %653 = vmatprep.subr.bf16.mxu0 0
      %654 = vmatpush1.bf16.msra.mxu0 0
      %655 = vmatprep.subr.bf16.mxu0 0
      %656 = vmatpush1.bf16.msra.mxu0 0
      %657 = vmatprep.subr.bf16.mxu0 0
      %658 = vmatpush1.bf16.msra.mxu0 0
      %659 = vmatprep.subr.bf16.mxu0 0
      %660 = vmatpush1.bf16.msra.mxu0 %v643
      %661 = vmatprep.subr.bf16.mxu0 0
      %662 = vmatpush2.bf16.msra.mxu0 0
      %663 = vmatprep.subr.bf16.mxu0 0
      %664 = vmatpush2.bf16.msra.mxu0 0
      %665 = vmatprep.subr.bf16.mxu0 0
      %666 = vmatpush2.bf16.msra.mxu0 0
      %667 = vmatprep.subr.bf16.mxu0 0
      %668 = vmatpush2.bf16.msra.mxu0 0
      %669 = vmatprep.subr.bf16.mxu0 0
      %670 = vmatpush2.bf16.msra.mxu0 0
      %671 = vmatprep.subr.bf16.mxu0 0
      %672 = vmatpush2.bf16.msra.mxu0 0
      %673 = vmatprep.subr.bf16.mxu0 0
      %674 = vmatpush2.bf16.msra.mxu0 0
      %675 = vmatprep.subr.bf16.mxu0 0
      %676 = vmatpush2.bf16.msra.mxu0 0
      %677 = vmatprep.mubr.bf16.mxu0 0
      %678 = vmatmul.mubr.bf16.gmra.mxu0 %v640
      %v679 = vpop.f32.mrf.mxu0
      %v680 = vadd.f32 0.0, %v679
      %v681 = vpop.f32.mrf.mxu0
      %v682 = vpop.f32.mrf.mxu0
      %v683 = vadd.f32 0.0, %v682
      %v684 = vpop.f32.mrf.mxu0
      %685 = vdwg.mxu0
      %v686 = vadd.f32 %v631, %v680
      %v687 = vadd.f32 %v634, %v683
      %v688 = vld [vmem:[%s5] sm:$0x1]
      %v690 = vlaneseq
      %v691 = vshrl.u32 %v690, 7
      %v692 = vsub.s32 0, %v691
      %v693 = vrot.slane %v688, %v692
      %v695 = vmul.f32 %v686, %v693
      %v696 = vmul.f32 %v687, %v693
      %v697 = vld [vmem:[%s6] sm:$0x1]
      %v699 = vlaneseq
      %v700 = vshrl.u32 %v699, 7
      %v701 = vsub.s32 0, %v700
      %v702 = vrot.slane %v697, %v701
      %v704 = vadd.f32 %v695, %v702
      %v705 = vadd.f32 %v696, %v702
      %v706 = vadd.f32 %v285, %v704
      %v707 = vadd.f32 %v286, %v705
      %v708 = vmax.f32 %v706, 0.0
      %v709 = vmax.f32 %v707, 0.0
      %710 = vst.msk [vmem:[%s280] sm:$0xff] %vm360, %v708
      %711 = vst.msk [vmem:[%s280 + $0x8] sm:$0xff] %vm360, %v709
      %s712 = smul.u32 2, %s18
      %p713 = scmp.lt.s32.totalorder %s712, 3
      %s714 = scalar_select %p713, %s712, 3
      %s715 = smul.addr %s714, 8
      %s716 = scalar_lea.vmem %s7, %s715
      // Predicated region
      $region49: #{tpu_custom_call.1} parent=47 // pred_check
        %p717 = pneg %p188
      $region50: #{tpu_custom_call.1} parent=47 // pred_check_branch
        %719 = sbr.rel (%p717) target = $region52
      $region51: #{tpu_custom_call.1} parent=47 // pred_region
        %s720 = smul.u32 2, %s18
      $region52: #{tpu_custom_call.1} parent=47 // pred_fallthru
        _
    $region48: #{tpu_custom_call.1} parent=5 // pred_fallthru
      _
    %p721 = scmp.le.s32.totalorder 2, %s13
    // Predicated region
    $region53: #{tpu_custom_call.1} parent=5 // pred_check
      %p722 = pneg %p721
    $region54: #{tpu_custom_call.1} parent=5 // pred_check_branch
      %724 = sbr.rel (%p722) target = $region56
    $region55: #{tpu_custom_call.1} parent=5 // pred_region
      %s725 = ssub.s32 %s13, 2
      // Predicated region
      $region57: #{tpu_custom_call.1} parent=55 // pred_check
        %p726 = pneg %p194
      $region58: #{tpu_custom_call.1} parent=55 // pred_check_branch
        %728 = sbr.rel (%p726) target = $region60
      $region59: #{tpu_custom_call.1} parent=55 // pred_region
        %s729 = smul.u32 2, %s19
        %p730 = scmp.lt.s32.totalorder %s729, 3
        %s731 = scalar_select %p730, %s729, 3
        %s732 = smul.addr %s731, 8
        %s733 = scalar_lea.vmem %s7, %s732
      $region60: #{tpu_custom_call.1} parent=55 // pred_fallthru
        _
    $region56: #{tpu_custom_call.1} parent=5 // pred_fallthru
      _
  $region6: #{tpu_custom_call.1} parent=0 // loop_footer
    %s17 = sadd.s32 1, %s13
  $region7: #{tpu_custom_call.1} parent=0 // loop_footer_branch
    %12 = sbr.rel target = $region3
  $region8: #{tpu_custom_call.1} parent=0 // loop_exit
    _

</llo_original>
